<compile_context>
chip_gen: v7x
topology: tpu7x:2x2x1
jax: 0.10.0
libtpu: 0.0.40
codegen_flags: <defaults>
</compile_context>

<pallas_src>
import functools

import jax
import jax.numpy as jnp
from jax.experimental import pallas as pl
from jax.experimental.pallas import tpu as pltpu


_VMEM = pl.BlockSpec(memory_space=pltpu.MemorySpace.VMEM)


# ---------------------------------------------------------------------------
# Fused Pallas kernel: all GIN layers + BatchNorms + global_add_pool
# ---------------------------------------------------------------------------
def _gin_encoder_kernel(a_ref, x_ref, sel_ref, *refs,
                        num_layers, hidden_dim, gin_eps, bn_eps):
    param_refs = refs[:6 * num_layers]
    global_ref = refs[6 * num_layers]       # [G, L*H]
    patches_ref = refs[6 * num_layers + 1]  # [N, L*H]

    a = a_ref[...]        # bf16 [N, N] — loaded once, resident for every layer
    sel = sel_ref[...]    # f32  [G, N] — one_hot(batch)^T
    h = x_ref[...]        # f32  [N, D_in]

    for l in range(num_layers):
        w1, b1, w2, b2, gamma, beta = param_refs[6 * l:6 * l + 6]

        # GINConv aggregation: (1 + eps) * h_i + sum_{j in N(i)} h_j
        # bf16 operands into the MXU, f32 accumulation.
        agg = jnp.dot(a, h.astype(jnp.bfloat16),
                      preferred_element_type=jnp.float32)
        z = h + agg if gin_eps == 0.0 else (1.0 + gin_eps) * h + agg

        # MLP: Linear -> ReLU -> Linear, then the outer F.relu (all f32).
        z = jnp.dot(z, w1[...], preferred_element_type=jnp.float32) + b1[...]
        z = jnp.maximum(z, 0.0)
        z = jnp.dot(z, w2[...], preferred_element_type=jnp.float32) + b2[...]
        r = jnp.maximum(z, 0.0)

        # BatchNorm1d (training-mode batch statistics, biased variance),
        # folded into one scale/shift FMA over the [N, H] tile.
        inv_n = 1.0 / r.shape[0]
        mean = jnp.sum(r, axis=0, keepdims=True) * inv_n
        var = jnp.maximum(
            jnp.sum(r * r, axis=0, keepdims=True) * inv_n - mean * mean, 0.0)
        scale = gamma[...] * jax.lax.rsqrt(var + bn_eps)
        shift = beta[...] - mean * scale
        h = r * scale + shift

        # Write this layer's slice of x_patches (no JAX-side concatenate) and its
        # global_add_pool slice (pool fused: data is already resident in VMEM).
        col = slice(l * hidden_dim, (l + 1) * hidden_dim)
        patches_ref[:, col] = h
        global_ref[:, col] = jnp.dot(sel, h, preferred_element_type=jnp.float32)


# ---------------------------------------------------------------------------
# Wrapper
# ---------------------------------------------------------------------------
def gin_encoder_forward(x, edge_index, batch, params, num_graphs,
                        *, gin_eps=0.0, bn_eps=1e-5):
    """Reproduces GINEncoder.forward: returns (x_global, x_patches)."""
    n = x.shape[0]
    num_layers = len(params)
    hidden_dim = params[0][0].shape[1]

    src, dst = edge_index[0], edge_index[1]
    # Dense adjacency: A[i, j] = #edges j -> i, so A @ h sums incoming messages.
    # Cast to bf16: small integer edge counts are exact in bf16, HBM traffic halves.
    a = jnp.zeros((n, n), jnp.float32).at[dst, src].add(1.0).astype(jnp.bfloat16)
    # global_add_pool selector (one-hot of graph id, transposed): [G, N].
    sel = jax.nn.one_hot(batch, num_graphs, dtype=jnp.float32).T

    flat_params = [p for layer in params for p in layer]
    kernel = functools.partial(_gin_encoder_kernel, num_layers=num_layers,
                               hidden_dim=hidden_dim, gin_eps=gin_eps,
                               bn_eps=bn_eps)

    x_global, x_patches = pl.pallas_call(
        kernel,
        out_shape=(
            jax.ShapeDtypeStruct((num_graphs, num_layers * hidden_dim), jnp.float32),
            jax.ShapeDtypeStruct((n, num_layers * hidden_dim), jnp.float32),
        ),
        in_specs=[_VMEM] * (3 + 6 * num_layers),
        out_specs=(_VMEM, _VMEM),
    )(a, x, sel, *flat_params)
    return x_global, x_patches


# ---------------------------------------------------------------------------
# Deterministic parameter init (mimics nn.Linear default; BN weight=1, bias=0)
# ---------------------------------------------------------------------------
def init_params(key, input_dim, hidden_dim, num_layers):
    params = []
    for i in range(num_layers):
        d_in = input_dim if i == 0 else hidden_dim
        key, k1, k2, k3, k4 = jax.random.split(key, 5)
        bound1 = 1.0 / jnp.sqrt(d_in)
        bound2 = 1.0 / jnp.sqrt(hidden_dim)
        w1 = jax.random.uniform(k1, (d_in, hidden_dim), jnp.float32, -bound1, bound1)
        b1 = jax.random.uniform(k2, (1, hidden_dim), jnp.float32, -bound1, bound1)
        w2 = jax.random.uniform(k3, (hidden_dim, hidden_dim), jnp.float32, -bound2, bound2)
        b2 = jax.random.uniform(k4, (1, hidden_dim), jnp.float32, -bound2, bound2)
        gamma = jnp.ones((1, hidden_dim), jnp.float32)
        beta = jnp.zeros((1, hidden_dim), jnp.float32)
        params.append((w1, b1, w2, b2, gamma, beta))
    return params


# ---------------------------------------------------------------------------
# Pure-JAX reference (mirrors the kernel's bf16 aggregation operands so the
# check is tight; vs a strict f32 PyTorch forward the only extra difference is
# bf16 rounding of the aggregated node features — A itself is exact in bf16).
# ---------------------------------------------------------------------------
def reference_forward(x, edge_index, batch, params, num_graphs,
                      *, gin_eps=0.0, bn_eps=1e-5):
    n = x.shape[0]
    src, dst = edge_index[0], edge_index[1]
    a = jnp.zeros((n, n), jnp.float32).at[dst, src].add(1.0).astype(jnp.bfloat16)
    xs = []
    h = x
    for (w1, b1, w2, b2, gamma, beta) in params:
        agg = jnp.dot(a, h.astype(jnp.bfloat16),
                      preferred_element_type=jnp.float32)
        z = (1.0 + gin_eps) * h + agg
        z = jnp.maximum(z @ w1 + b1, 0.0)
        z = z @ w2 + b2
        r = jnp.maximum(z, 0.0)
        mean = r.mean(axis=0, keepdims=True)
        var = ((r - mean) ** 2).mean(axis=0, keepdims=True)
        h = gamma * (r - mean) / jnp.sqrt(var + bn_eps) + beta
        xs.append(h)
    x_patches = jnp.concatenate(xs, axis=1)
    sel = jax.nn.one_hot(batch, num_graphs, dtype=jnp.float32).T
    return sel @ x_patches, x_patches


# ---------------------------------------------------------------------------
# Main
# ---------------------------------------------------------------------------
if __name__ == "__main__":
    key = jax.random.PRNGKey(0)

    # Small graph problem: 2 graphs of 16 nodes each (ring topology, bidirectional).
    num_graphs = 2
    nodes_per_graph = 16
    n_nodes = num_graphs * nodes_per_graph
    input_dim = 16
    hidden_dim = 32
    num_layers = 3

    key, kx, kp = jax.random.split(key, 3)
    x = jax.random.normal(kx, (n_nodes, input_dim), jnp.float32)

    srcs, dsts = [], []
    for g in range(num_graphs):
        base = g * nodes_per_graph
        for i in range(nodes_per_graph):
            j = (i + 1) % nodes_per_graph
            srcs += [base + i, base + j]
            dsts += [base + j, base + i]
    edge_index = jnp.array([srcs, dsts], dtype=jnp.int32)  # [2, E]
    batch = jnp.repeat(jnp.arange(num_graphs, dtype=jnp.int32), nodes_per_graph)

    params = init_params(kp, input_dim, hidden_dim, num_layers)

    x_global, x_patches = gin_encoder_forward(x, edge_index, batch, params, num_graphs)
    jax.block_until_ready((x_global, x_patches))

    # Sanity check against the pure-JAX reference.
    ref_global, ref_patches = reference_forward(x, edge_index, batch, params, num_graphs)
    assert x_global.shape == (num_graphs, num_layers * hidden_dim)
    assert x_patches.shape == (n_nodes, num_layers * hidden_dim)
    assert jnp.allclose(x_patches, ref_patches, atol=1e-2, rtol=1e-2)
    assert jnp.allclose(x_global, ref_global, atol=5e-2, rtol=1e-2)

    print("KERNEL_OK")
</pallas_src>

<mosaic_0001>
module attributes {stable_mosaic.version = 11 : i64} {
  func.func @_gin_encoder_kernel(%arg0: memref<32x32xbf16, #tpu.memory_space<vmem>>, %arg1: memref<32x16xf32, #tpu.memory_space<vmem>>, %arg2: memref<2x32xf32, #tpu.memory_space<vmem>>, %arg3: memref<16x32xf32, #tpu.memory_space<vmem>>, %arg4: memref<1x32xf32, #tpu.memory_space<vmem>>, %arg5: memref<32x32xf32, #tpu.memory_space<vmem>>, %arg6: memref<1x32xf32, #tpu.memory_space<vmem>>, %arg7: memref<1x32xf32, #tpu.memory_space<vmem>>, %arg8: memref<1x32xf32, #tpu.memory_space<vmem>>, %arg9: memref<32x32xf32, #tpu.memory_space<vmem>>, %arg10: memref<1x32xf32, #tpu.memory_space<vmem>>, %arg11: memref<32x32xf32, #tpu.memory_space<vmem>>, %arg12: memref<1x32xf32, #tpu.memory_space<vmem>>, %arg13: memref<1x32xf32, #tpu.memory_space<vmem>>, %arg14: memref<1x32xf32, #tpu.memory_space<vmem>>, %arg15: memref<32x32xf32, #tpu.memory_space<vmem>>, %arg16: memref<1x32xf32, #tpu.memory_space<vmem>>, %arg17: memref<32x32xf32, #tpu.memory_space<vmem>>, %arg18: memref<1x32xf32, #tpu.memory_space<vmem>>, %arg19: memref<1x32xf32, #tpu.memory_space<vmem>>, %arg20: memref<1x32xf32, #tpu.memory_space<vmem>>, %arg21: memref<2x96xf32, #tpu.memory_space<vmem>>, %arg22: memref<32x96xf32, #tpu.memory_space<vmem>>) attributes {dimension_semantics = [], scalar_prefetch = 0 : i64, scratch_operands = 0 : i64, tpu.core_type = #tpu.core_type<tc>} {
    %c0 = arith.constant 0 : index
    %c0_0 = arith.constant 0 : index
    %0 = vector.load %arg0[%c0, %c0_0] : memref<32x32xbf16, #tpu.memory_space<vmem>>, vector<32x32xbf16>
    %c0_1 = arith.constant 0 : index
    %c0_2 = arith.constant 0 : index
    %1 = vector.load %arg2[%c0_1, %c0_2] : memref<2x32xf32, #tpu.memory_space<vmem>>, vector<2x32xf32>
    %c0_3 = arith.constant 0 : index
    %c0_4 = arith.constant 0 : index
    %2 = vector.load %arg1[%c0_3, %c0_4] : memref<32x16xf32, #tpu.memory_space<vmem>>, vector<32x16xf32>
    %3 = arith.truncf %2 : vector<32x16xf32> to vector<32x16xbf16>
    %cst = arith.constant dense<0.000000e+00> : vector<32x16xf32>
    %4 = tpu.matmul %0, %3, %cst {dimension_numbers = #tpu.dot_dimension_numbers<[1], [0], [0], [1], [0, 0, 1, 1], [], []>} : vector<32x32xbf16>, vector<32x16xbf16>, vector<32x16xf32> -> vector<32x16xf32>
    %5 = arith.addf %2, %4 : vector<32x16xf32>
    %c0_5 = arith.constant 0 : index
    %c0_6 = arith.constant 0 : index
    %6 = vector.load %arg3[%c0_5, %c0_6] : memref<16x32xf32, #tpu.memory_space<vmem>>, vector<16x32xf32>
    %cst_7 = arith.constant dense<0.000000e+00> : vector<32x32xf32>
    %7 = tpu.matmul %5, %6, %cst_7 {dimension_numbers = #tpu.dot_dimension_numbers<[1], [0], [0], [1], [0, 0, 1, 1], [], []>} : vector<32x16xf32>, vector<16x32xf32>, vector<32x32xf32> -> vector<32x32xf32>
    %c0_8 = arith.constant 0 : index
    %c0_9 = arith.constant 0 : index
    %8 = vector.load %arg4[%c0_8, %c0_9] : memref<1x32xf32, #tpu.memory_space<vmem>>, vector<1x32xf32>
    %9 = vector.broadcast %8 : vector<1x32xf32> to vector<32x32xf32>
    %10 = arith.addf %7, %9 : vector<32x32xf32>
    %cst_10 = arith.constant 0.000000e+00 : f32
    %11 = vector.broadcast %cst_10 : f32 to vector<32x32xf32>
    %12 = arith.maximumf %10, %11 : vector<32x32xf32>
    %c0_11 = arith.constant 0 : index
    %c0_12 = arith.constant 0 : index
    %13 = vector.load %arg5[%c0_11, %c0_12] : memref<32x32xf32, #tpu.memory_space<vmem>>, vector<32x32xf32>
    %cst_13 = arith.constant dense<0.000000e+00> : vector<32x32xf32>
    %14 = tpu.matmul %12, %13, %cst_13 {dimension_numbers = #tpu.dot_dimension_numbers<[1], [0], [0], [1], [0, 0, 1, 1], [], []>} : vector<32x32xf32>, vector<32x32xf32>, vector<32x32xf32> -> vector<32x32xf32>
    %c0_14 = arith.constant 0 : index
    %c0_15 = arith.constant 0 : index
    %15 = vector.load %arg6[%c0_14, %c0_15] : memref<1x32xf32, #tpu.memory_space<vmem>>, vector<1x32xf32>
    %16 = vector.broadcast %15 : vector<1x32xf32> to vector<32x32xf32>
    %17 = arith.addf %14, %16 : vector<32x32xf32>
    %cst_16 = arith.constant 0.000000e+00 : f32
    %18 = vector.broadcast %cst_16 : f32 to vector<32x32xf32>
    %19 = arith.maximumf %17, %18 : vector<32x32xf32>
    %cst_17 = arith.constant dense<0.000000e+00> : vector<32xf32>
    %20 = vector.multi_reduction <add>, %19, %cst_17 [0] : vector<32x32xf32> to vector<32xf32>
    %21 = vector.shape_cast %20 : vector<32xf32> to vector<1x32xf32>
    %cst_18 = arith.constant 3.125000e-02 : f32
    %22 = vector.broadcast %cst_18 : f32 to vector<1x32xf32>
    %23 = arith.mulf %21, %22 : vector<1x32xf32>
    %24 = arith.mulf %19, %19 : vector<32x32xf32>
    %cst_19 = arith.constant dense<0.000000e+00> : vector<32xf32>
    %25 = vector.multi_reduction <add>, %24, %cst_19 [0] : vector<32x32xf32> to vector<32xf32>
    %26 = vector.shape_cast %25 : vector<32xf32> to vector<1x32xf32>
    %cst_20 = arith.constant 3.125000e-02 : f32
    %27 = vector.broadcast %cst_20 : f32 to vector<1x32xf32>
    %28 = arith.mulf %26, %27 : vector<1x32xf32>
    %29 = arith.mulf %23, %23 : vector<1x32xf32>
    %30 = arith.subf %28, %29 : vector<1x32xf32>
    %cst_21 = arith.constant 0.000000e+00 : f32
    %31 = vector.broadcast %cst_21 : f32 to vector<1x32xf32>
    %32 = arith.maximumf %30, %31 : vector<1x32xf32>
    %c0_22 = arith.constant 0 : index
    %c0_23 = arith.constant 0 : index
    %33 = vector.load %arg7[%c0_22, %c0_23] : memref<1x32xf32, #tpu.memory_space<vmem>>, vector<1x32xf32>
    %cst_24 = arith.constant 9.99999974E-6 : f32
    %34 = vector.broadcast %cst_24 : f32 to vector<1x32xf32>
    %35 = arith.addf %32, %34 : vector<1x32xf32>
    %36 = math.rsqrt %35 : vector<1x32xf32>
    %37 = arith.mulf %33, %36 : vector<1x32xf32>
    %c0_25 = arith.constant 0 : index
    %c0_26 = arith.constant 0 : index
    %38 = vector.load %arg8[%c0_25, %c0_26] : memref<1x32xf32, #tpu.memory_space<vmem>>, vector<1x32xf32>
    %39 = arith.mulf %23, %37 : vector<1x32xf32>
    %40 = arith.subf %38, %39 : vector<1x32xf32>
    %41 = vector.broadcast %37 : vector<1x32xf32> to vector<32x32xf32>
    %42 = arith.mulf %19, %41 : vector<32x32xf32>
    %43 = vector.broadcast %40 : vector<1x32xf32> to vector<32x32xf32>
    %44 = arith.addf %42, %43 : vector<32x32xf32>
    %c0_27 = arith.constant 0 : index
    %c0_28 = arith.constant 0 : index
    %45 = vector.load %arg22[%c0_27, %c0_28] : memref<32x96xf32, #tpu.memory_space<vmem>>, vector<32x32xf32>
    tpu.vector_store %arg22[%c0_27, %c0_28], %44 {strides = array<i32>} : memref<32x96xf32, #tpu.memory_space<vmem>>, vector<32x32xf32>,
    %cst_29 = arith.constant dense<0.000000e+00> : vector<2x32xf32>
    %46 = tpu.matmul %1, %44, %cst_29 {dimension_numbers = #tpu.dot_dimension_numbers<[1], [0], [0], [1], [0, 0, 1, 1], [], []>} : vector<2x32xf32>, vector<32x32xf32>, vector<2x32xf32> -> vector<2x32xf32>
    %c0_30 = arith.constant 0 : index
    %c0_31 = arith.constant 0 : index
    %47 = vector.load %arg21[%c0_30, %c0_31] : memref<2x96xf32, #tpu.memory_space<vmem>>, vector<2x32xf32>
    tpu.vector_store %arg21[%c0_30, %c0_31], %46 {strides = array<i32>} : memref<2x96xf32, #tpu.memory_space<vmem>>, vector<2x32xf32>,
    %48 = arith.truncf %44 : vector<32x32xf32> to vector<32x32xbf16>
    %cst_32 = arith.constant dense<0.000000e+00> : vector<32x32xf32>
    %49 = tpu.matmul %0, %48, %cst_32 {dimension_numbers = #tpu.dot_dimension_numbers<[1], [0], [0], [1], [0, 0, 1, 1], [], []>} : vector<32x32xbf16>, vector<32x32xbf16>, vector<32x32xf32> -> vector<32x32xf32>
    %50 = arith.addf %44, %49 : vector<32x32xf32>
    %c0_33 = arith.constant 0 : index
    %c0_34 = arith.constant 0 : index
    %51 = vector.load %arg9[%c0_33, %c0_34] : memref<32x32xf32, #tpu.memory_space<vmem>>, vector<32x32xf32>
    %cst_35 = arith.constant dense<0.000000e+00> : vector<32x32xf32>
    %52 = tpu.matmul %50, %51, %cst_35 {dimension_numbers = #tpu.dot_dimension_numbers<[1], [0], [0], [1], [0, 0, 1, 1], [], []>} : vector<32x32xf32>, vector<32x32xf32>, vector<32x32xf32> -> vector<32x32xf32>
    %c0_36 = arith.constant 0 : index
    %c0_37 = arith.constant 0 : index
    %53 = vector.load %arg10[%c0_36, %c0_37] : memref<1x32xf32, #tpu.memory_space<vmem>>, vector<1x32xf32>
    %54 = vector.broadcast %53 : vector<1x32xf32> to vector<32x32xf32>
    %55 = arith.addf %52, %54 : vector<32x32xf32>
    %cst_38 = arith.constant 0.000000e+00 : f32
    %56 = vector.broadcast %cst_38 : f32 to vector<32x32xf32>
    %57 = arith.maximumf %55, %56 : vector<32x32xf32>
    %c0_39 = arith.constant 0 : index
    %c0_40 = arith.constant 0 : index
    %58 = vector.load %arg11[%c0_39, %c0_40] : memref<32x32xf32, #tpu.memory_space<vmem>>, vector<32x32xf32>
    %cst_41 = arith.constant dense<0.000000e+00> : vector<32x32xf32>
    %59 = tpu.matmul %57, %58, %cst_41 {dimension_numbers = #tpu.dot_dimension_numbers<[1], [0], [0], [1], [0, 0, 1, 1], [], []>} : vector<32x32xf32>, vector<32x32xf32>, vector<32x32xf32> -> vector<32x32xf32>
    %c0_42 = arith.constant 0 : index
    %c0_43 = arith.constant 0 : index
    %60 = vector.load %arg12[%c0_42, %c0_43] : memref<1x32xf32, #tpu.memory_space<vmem>>, vector<1x32xf32>
    %61 = vector.broadcast %60 : vector<1x32xf32> to vector<32x32xf32>
    %62 = arith.addf %59, %61 : vector<32x32xf32>
    %cst_44 = arith.constant 0.000000e+00 : f32
    %63 = vector.broadcast %cst_44 : f32 to vector<32x32xf32>
    %64 = arith.maximumf %62, %63 : vector<32x32xf32>
    %cst_45 = arith.constant dense<0.000000e+00> : vector<32xf32>
    %65 = vector.multi_reduction <add>, %64, %cst_45 [0] : vector<32x32xf32> to vector<32xf32>
    %66 = vector.shape_cast %65 : vector<32xf32> to vector<1x32xf32>
    %cst_46 = arith.constant 3.125000e-02 : f32
    %67 = vector.broadcast %cst_46 : f32 to vector<1x32xf32>
    %68 = arith.mulf %66, %67 : vector<1x32xf32>
    %69 = arith.mulf %64, %64 : vector<32x32xf32>
    %cst_47 = arith.constant dense<0.000000e+00> : vector<32xf32>
    %70 = vector.multi_reduction <add>, %69, %cst_47 [0] : vector<32x32xf32> to vector<32xf32>
    %71 = vector.shape_cast %70 : vector<32xf32> to vector<1x32xf32>
    %cst_48 = arith.constant 3.125000e-02 : f32
    %72 = vector.broadcast %cst_48 : f32 to vector<1x32xf32>
    %73 = arith.mulf %71, %72 : vector<1x32xf32>
    %74 = arith.mulf %68, %68 : vector<1x32xf32>
    %75 = arith.subf %73, %74 : vector<1x32xf32>
    %cst_49 = arith.constant 0.000000e+00 : f32
    %76 = vector.broadcast %cst_49 : f32 to vector<1x32xf32>
    %77 = arith.maximumf %75, %76 : vector<1x32xf32>
    %c0_50 = arith.constant 0 : index
    %c0_51 = arith.constant 0 : index
    %78 = vector.load %arg13[%c0_50, %c0_51] : memref<1x32xf32, #tpu.memory_space<vmem>>, vector<1x32xf32>
    %cst_52 = arith.constant 9.99999974E-6 : f32
    %79 = vector.broadcast %cst_52 : f32 to vector<1x32xf32>
    %80 = arith.addf %77, %79 : vector<1x32xf32>
    %81 = math.rsqrt %80 : vector<1x32xf32>
    %82 = arith.mulf %78, %81 : vector<1x32xf32>
    %c0_53 = arith.constant 0 : index
    %c0_54 = arith.constant 0 : index
    %83 = vector.load %arg14[%c0_53, %c0_54] : memref<1x32xf32, #tpu.memory_space<vmem>>, vector<1x32xf32>
    %84 = arith.mulf %68, %82 : vector<1x32xf32>
    %85 = arith.subf %83, %84 : vector<1x32xf32>
    %86 = vector.broadcast %82 : vector<1x32xf32> to vector<32x32xf32>
    %87 = arith.mulf %64, %86 : vector<32x32xf32>
    %88 = vector.broadcast %85 : vector<1x32xf32> to vector<32x32xf32>
    %89 = arith.addf %87, %88 : vector<32x32xf32>
    %c0_55 = arith.constant 0 : index
    %c32 = arith.constant 32 : index
    %90 = vector.load %arg22[%c0_55, %c32] : memref<32x96xf32, #tpu.memory_space<vmem>>, vector<32x32xf32>
    tpu.vector_store %arg22[%c0_55, %c32], %89 {strides = array<i32>} : memref<32x96xf32, #tpu.memory_space<vmem>>, vector<32x32xf32>,
    %cst_56 = arith.constant dense<0.000000e+00> : vector<2x32xf32>
    %91 = tpu.matmul %1, %89, %cst_56 {dimension_numbers = #tpu.dot_dimension_numbers<[1], [0], [0], [1], [0, 0, 1, 1], [], []>} : vector<2x32xf32>, vector<32x32xf32>, vector<2x32xf32> -> vector<2x32xf32>
    %c0_57 = arith.constant 0 : index
    %c32_58 = arith.constant 32 : index
    %92 = vector.load %arg21[%c0_57, %c32_58] : memref<2x96xf32, #tpu.memory_space<vmem>>, vector<2x32xf32>
    tpu.vector_store %arg21[%c0_57, %c32_58], %91 {strides = array<i32>} : memref<2x96xf32, #tpu.memory_space<vmem>>, vector<2x32xf32>,
    %93 = arith.truncf %89 : vector<32x32xf32> to vector<32x32xbf16>
    %cst_59 = arith.constant dense<0.000000e+00> : vector<32x32xf32>
    %94 = tpu.matmul %0, %93, %cst_59 {dimension_numbers = #tpu.dot_dimension_numbers<[1], [0], [0], [1], [0, 0, 1, 1], [], []>} : vector<32x32xbf16>, vector<32x32xbf16>, vector<32x32xf32> -> vector<32x32xf32>
    %95 = arith.addf %89, %94 : vector<32x32xf32>
    %c0_60 = arith.constant 0 : index
    %c0_61 = arith.constant 0 : index
    %96 = vector.load %arg15[%c0_60, %c0_61] : memref<32x32xf32, #tpu.memory_space<vmem>>, vector<32x32xf32>
    %cst_62 = arith.constant dense<0.000000e+00> : vector<32x32xf32>
    %97 = tpu.matmul %95, %96, %cst_62 {dimension_numbers = #tpu.dot_dimension_numbers<[1], [0], [0], [1], [0, 0, 1, 1], [], []>} : vector<32x32xf32>, vector<32x32xf32>, vector<32x32xf32> -> vector<32x32xf32>
    %c0_63 = arith.constant 0 : index
    %c0_64 = arith.constant 0 : index
    %98 = vector.load %arg16[%c0_63, %c0_64] : memref<1x32xf32, #tpu.memory_space<vmem>>, vector<1x32xf32>
    %99 = vector.broadcast %98 : vector<1x32xf32> to vector<32x32xf32>
    %100 = arith.addf %97, %99 : vector<32x32xf32>
    %cst_65 = arith.constant 0.000000e+00 : f32
    %101 = vector.broadcast %cst_65 : f32 to vector<32x32xf32>
    %102 = arith.maximumf %100, %101 : vector<32x32xf32>
    %c0_66 = arith.constant 0 : index
    %c0_67 = arith.constant 0 : index
    %103 = vector.load %arg17[%c0_66, %c0_67] : memref<32x32xf32, #tpu.memory_space<vmem>>, vector<32x32xf32>
    %cst_68 = arith.constant dense<0.000000e+00> : vector<32x32xf32>
    %104 = tpu.matmul %102, %103, %cst_68 {dimension_numbers = #tpu.dot_dimension_numbers<[1], [0], [0], [1], [0, 0, 1, 1], [], []>} : vector<32x32xf32>, vector<32x32xf32>, vector<32x32xf32> -> vector<32x32xf32>
    %c0_69 = arith.constant 0 : index
    %c0_70 = arith.constant 0 : index
    %105 = vector.load %arg18[%c0_69, %c0_70] : memref<1x32xf32, #tpu.memory_space<vmem>>, vector<1x32xf32>
    %106 = vector.broadcast %105 : vector<1x32xf32> to vector<32x32xf32>
    %107 = arith.addf %104, %106 : vector<32x32xf32>
    %cst_71 = arith.constant 0.000000e+00 : f32
    %108 = vector.broadcast %cst_71 : f32 to vector<32x32xf32>
    %109 = arith.maximumf %107, %108 : vector<32x32xf32>
    %cst_72 = arith.constant dense<0.000000e+00> : vector<32xf32>
    %110 = vector.multi_reduction <add>, %109, %cst_72 [0] : vector<32x32xf32> to vector<32xf32>
    %111 = vector.shape_cast %110 : vector<32xf32> to vector<1x32xf32>
    %cst_73 = arith.constant 3.125000e-02 : f32
    %112 = vector.broadcast %cst_73 : f32 to vector<1x32xf32>
    %113 = arith.mulf %111, %112 : vector<1x32xf32>
    %114 = arith.mulf %109, %109 : vector<32x32xf32>
    %cst_74 = arith.constant dense<0.000000e+00> : vector<32xf32>
    %115 = vector.multi_reduction <add>, %114, %cst_74 [0] : vector<32x32xf32> to vector<32xf32>
    %116 = vector.shape_cast %115 : vector<32xf32> to vector<1x32xf32>
    %cst_75 = arith.constant 3.125000e-02 : f32
    %117 = vector.broadcast %cst_75 : f32 to vector<1x32xf32>
    %118 = arith.mulf %116, %117 : vector<1x32xf32>
    %119 = arith.mulf %113, %113 : vector<1x32xf32>
    %120 = arith.subf %118, %119 : vector<1x32xf32>
    %cst_76 = arith.constant 0.000000e+00 : f32
    %121 = vector.broadcast %cst_76 : f32 to vector<1x32xf32>
    %122 = arith.maximumf %120, %121 : vector<1x32xf32>
    %c0_77 = arith.constant 0 : index
    %c0_78 = arith.constant 0 : index
    %123 = vector.load %arg19[%c0_77, %c0_78] : memref<1x32xf32, #tpu.memory_space<vmem>>, vector<1x32xf32>
    %cst_79 = arith.constant 9.99999974E-6 : f32
    %124 = vector.broadcast %cst_79 : f32 to vector<1x32xf32>
    %125 = arith.addf %122, %124 : vector<1x32xf32>
    %126 = math.rsqrt %125 : vector<1x32xf32>
    %127 = arith.mulf %123, %126 : vector<1x32xf32>
    %c0_80 = arith.constant 0 : index
    %c0_81 = arith.constant 0 : index
    %128 = vector.load %arg20[%c0_80, %c0_81] : memref<1x32xf32, #tpu.memory_space<vmem>>, vector<1x32xf32>
    %129 = arith.mulf %113, %127 : vector<1x32xf32>
    %130 = arith.subf %128, %129 : vector<1x32xf32>
    %131 = vector.broadcast %127 : vector<1x32xf32> to vector<32x32xf32>
    %132 = arith.mulf %109, %131 : vector<32x32xf32>
    %133 = vector.broadcast %130 : vector<1x32xf32> to vector<32x32xf32>
    %134 = arith.addf %132, %133 : vector<32x32xf32>
    %c0_82 = arith.constant 0 : index
    %c64 = arith.constant 64 : index
    %135 = vector.load %arg22[%c0_82, %c64] : memref<32x96xf32, #tpu.memory_space<vmem>>, vector<32x32xf32>
    tpu.vector_store %arg22[%c0_82, %c64], %134 {strides = array<i32>} : memref<32x96xf32, #tpu.memory_space<vmem>>, vector<32x32xf32>,
    %cst_83 = arith.constant dense<0.000000e+00> : vector<2x32xf32>
    %136 = tpu.matmul %1, %134, %cst_83 {dimension_numbers = #tpu.dot_dimension_numbers<[1], [0], [0], [1], [0, 0, 1, 1], [], []>} : vector<2x32xf32>, vector<32x32xf32>, vector<2x32xf32> -> vector<2x32xf32>
    %c0_84 = arith.constant 0 : index
    %c64_85 = arith.constant 64 : index
    %137 = vector.load %arg21[%c0_84, %c64_85] : memref<2x96xf32, #tpu.memory_space<vmem>>, vector<2x32xf32>
    tpu.vector_store %arg21[%c0_84, %c64_85], %136 {strides = array<i32>} : memref<2x96xf32, #tpu.memory_space<vmem>>, vector<2x32xf32>,
    return
  }
}

</mosaic_0001>

<llo_original>
// kernel: tpu_custom_call.1
$region0: #{tpu_custom_call.1}
  #allocation0 [shape = 'u32[]', space=smem, size = 0x4, offset = 0x4, fixed_abs, tag = 'smem constant byte address 0x4 - core index']
  #allocation1 [shape = 'u32[144,128]{1,0:T(1,128)}', space=vmem, size = 0x12000, scoped, tag = 'internal scratch']
  %s0 = inlined_call_operand.hbm [shape: bf16[32,32], index: 0, kind: input, shape index: {}]
  %s1 = inlined_call_operand.vmem [shape: f32[32,16], index: 1, kind: input, shape index: {}]
  %s2 = inlined_call_operand.hbm [shape: f32[2,32], index: 2, kind: input, shape index: {}]
  %s3 = inlined_call_operand.hbm [shape: f32[16,32], index: 3, kind: input, shape index: {}]
  %s4 = inlined_call_operand.vmem [shape: f32[1,32], index: 4, kind: input, shape index: {}]
  %s5 = inlined_call_operand.vmem [shape: f32[32,32], index: 5, kind: input, shape index: {}]
  %s6 = inlined_call_operand.hbm [shape: f32[1,32], index: 6, kind: input, shape index: {}]
  %s7 = inlined_call_operand.hbm [shape: f32[1,32], index: 7, kind: input, shape index: {}]
  %s8 = inlined_call_operand.hbm [shape: f32[1,32], index: 8, kind: input, shape index: {}]
  %s9 = inlined_call_operand.vmem [shape: f32[32,32], index: 9, kind: input, shape index: {}]
  %s10 = inlined_call_operand.hbm [shape: f32[1,32], index: 10, kind: input, shape index: {}]
  %s11 = inlined_call_operand.hbm [shape: f32[32,32], index: 11, kind: input, shape index: {}]
  %s12 = inlined_call_operand.hbm [shape: f32[1,32], index: 12, kind: input, shape index: {}]
  %s13 = inlined_call_operand.hbm [shape: f32[1,32], index: 13, kind: input, shape index: {}]
  %s14 = inlined_call_operand.vmem [shape: f32[1,32], index: 14, kind: input, shape index: {}]
  %s15 = inlined_call_operand.vmem [shape: f32[32,32], index: 15, kind: input, shape index: {}]
  %s16 = inlined_call_operand.vmem [shape: f32[1,32], index: 16, kind: input, shape index: {}]
  %s17 = inlined_call_operand.hbm [shape: f32[32,32], index: 17, kind: input, shape index: {}]
  %s18 = inlined_call_operand.vmem [shape: f32[1,32], index: 18, kind: input, shape index: {}]
  %s19 = inlined_call_operand.vmem [shape: f32[1,32], index: 19, kind: input, shape index: {}]
  %s20 = inlined_call_operand.vmem [shape: f32[1,32], index: 20, kind: input, shape index: {}]
  %s21 = inlined_call_operand.hbm [shape: f32[2,96], index: 21, kind: output, shape index: {0}]
  %s22 = inlined_call_operand.hbm [shape: f32[32,96], index: 22, kind: output, shape index: {1}]
  %23 = xla_tuple %s21, %s22
  %s24 = sld [smem:[#allocation0]]
  $region146: #{tpu_custom_call.1} parent=0
    _
  %s26 = ssub.s32 1, %s24
  %s27 = scalar_select 0, %s26, %s24
  $region1: #{tpu_custom_call.1} parent=0
    #allocation2 [shape = 'u8[8192]{0}', space=vmem, size = 0x2000, scoped, tag = 'input window, operand 0, single buffered']
    #allocation3 [shape = 's32[1]{0}', space=sflag, size = 0x4, scoped, tag = 'scoped memory for tpu_custom_call.1']
    #allocation4 [shape = 's32[1]{0}', space=sflag, size = 0x4, scoped, tag = 'scoped memory for tpu_custom_call.1']
    #allocation5 [shape = 'u8[1024]{0}', space=vmem, size = 0x400, scoped, tag = 'input window, operand 2, single buffered']
    #allocation6 [shape = 's32[1]{0}', space=sflag, size = 0x4, scoped, tag = 'scoped memory for tpu_custom_call.1']
    #allocation7 [shape = 'u8[8192]{0}', space=vmem, size = 0x2000, scoped, tag = 'input window, operand 3, single buffered']
    #allocation8 [shape = 'u8[512]{0}', space=vmem, size = 0x400, scoped, tag = 'input window, operand 6, single buffered']
    #allocation9 [shape = 's32[1]{0}', space=sflag, size = 0x4, scoped, tag = 'scoped memory for tpu_custom_call.1']
    #allocation10 [shape = 'u8[512]{0}', space=vmem, size = 0x400, scoped, tag = 'input window, operand 7, single buffered']
    #allocation11 [shape = 'u8[512]{0}', space=vmem, size = 0x400, scoped, tag = 'input window, operand 8, single buffered']
    #allocation12 [shape = 's32[1]{0}', space=sflag, size = 0x4, scoped, tag = 'scoped memory for tpu_custom_call.1']
    #allocation13 [shape = 'u8[512]{0}', space=vmem, size = 0x400, scoped, tag = 'input window, operand 10, single buffered']
    #allocation14 [shape = 'u8[16384]{0}', space=vmem, size = 0x4000, scoped, tag = 'input window, operand 11, single buffered']
    #allocation15 [shape = 's32[1]{0}', space=sflag, size = 0x4, scoped, tag = 'scoped memory for tpu_custom_call.1']
    #allocation16 [shape = 'u8[512]{0}', space=vmem, size = 0x400, scoped, tag = 'input window, operand 12, single buffered']
    #allocation17 [shape = 'u8[512]{0}', space=vmem, size = 0x400, scoped, tag = 'input window, operand 13, single buffered']
    #allocation18 [shape = 's32[1]{0}', space=sflag, size = 0x4, scoped, tag = 'scoped memory for tpu_custom_call.1']
    #allocation19 [shape = 'u8[16384]{0}', space=vmem, size = 0x4000, scoped, tag = 'input window, operand 17, single buffered']
    #allocation20 [shape = 'u8[1024]{0}', space=vmem, size = 0x400, scoped, tag = 'output window, operand 0, single buffered']
    #allocation21 [shape = 'u8[16384]{0}', space=vmem, size = 0x4000, scoped, tag = 'output window, operand 1, single buffered']
    #allocation22 [shape = 's32[1]{0}', space=sflag, size = 0x4, scoped, tag = 'scoped memory for tpu_custom_call.1']
    %28 = vsyncpa [#allocation3], 0
    %29 = vsyncpa [#allocation6], 0
    %30 = vsyncpa [#allocation9], 0
    %31 = vsyncpa [#allocation12], 0
    %32 = vsyncpa [#allocation15], 0
    %33 = vsyncpa [#allocation18], 0
    %34 = vsyncpa [#allocation4], 0
    %35 = vsyncpa [#allocation22], 0
    // Predicated region
    $region2: #{tpu_custom_call.1} parent=1 // pred_check
      _
    $region3: #{tpu_custom_call.1} parent=1 // pred_check_branch
      %37 = sbr.rel (0) target = $region5
    $region4: #{tpu_custom_call.1} parent=1 // pred_region
      %s39 = ssub.s32 256, 256
      %40 = vsyncadd [#allocation3], %s39
      %s41 = sshll.u32 [#allocation2], 4
      %s42 = int_to_ptr.vmem [resolvable:$true] %s41
      %47 = dma.hbm_to_vmem [thread:$0]  %s0, 256, %s42, [#allocation3], 64, 64, 4
    $region5: #{tpu_custom_call.1} parent=1 // pred_fallthru
      _
    // Predicated region
    $region6: #{tpu_custom_call.1} parent=1 // pred_check
      _
    $region7: #{tpu_custom_call.1} parent=1 // pred_check_branch
      %49 = sbr.rel (0) target = $region9
    $region8: #{tpu_custom_call.1} parent=1 // pred_region
      _
    $region9: #{tpu_custom_call.1} parent=1 // pred_fallthru
      _
    // Predicated region
    $region10: #{tpu_custom_call.1} parent=1 // pred_check
      _
    $region11: #{tpu_custom_call.1} parent=1 // pred_check_branch
      %51 = sbr.rel (0) target = $region13
    $region12: #{tpu_custom_call.1} parent=1 // pred_region
      %s53 = ssub.s32 32, 32
      %54 = vsyncadd [#allocation6], %s53
      %s56 = sshll.u32 [#allocation5], 4
      %s57 = int_to_ptr.vmem [resolvable:$true] %s56
      %59 = dma.hbm_to_vmem [thread:$0]  %s2, 32, %s57, [#allocation6]
    $region13: #{tpu_custom_call.1} parent=1 // pred_fallthru
      _
    // Predicated region
    $region14: #{tpu_custom_call.1} parent=1 // pred_check
      _
    $region15: #{tpu_custom_call.1} parent=1 // pred_check_branch
      %61 = sbr.rel (0) target = $region17
    $region16: #{tpu_custom_call.1} parent=1 // pred_region
      %s63 = ssub.s32 256, 256
      %64 = vsyncadd [#allocation6], %s63
      %s65 = sshll.u32 [#allocation7], 4
      %s66 = int_to_ptr.vmem [resolvable:$true] %s65
      %71 = dma.hbm_to_vmem [thread:$0]  %s3, 256, %s66, [#allocation6], 128, 128, 8
    $region17: #{tpu_custom_call.1} parent=1 // pred_fallthru
      _
    // Predicated region
    $region18: #{tpu_custom_call.1} parent=1 // pred_check
      _
    $region19: #{tpu_custom_call.1} parent=1 // pred_check_branch
      %73 = sbr.rel (0) target = $region21
    $region20: #{tpu_custom_call.1} parent=1 // pred_region
      _
    $region21: #{tpu_custom_call.1} parent=1 // pred_fallthru
      _
    // Predicated region
    $region22: #{tpu_custom_call.1} parent=1 // pred_check
      _
    $region23: #{tpu_custom_call.1} parent=1 // pred_check_branch
      %75 = sbr.rel (0) target = $region25
    $region24: #{tpu_custom_call.1} parent=1 // pred_region
      _
    $region25: #{tpu_custom_call.1} parent=1 // pred_fallthru
      _
    // Predicated region
    $region26: #{tpu_custom_call.1} parent=1 // pred_check
      _
    $region27: #{tpu_custom_call.1} parent=1 // pred_check_branch
      %77 = sbr.rel (0) target = $region29
    $region28: #{tpu_custom_call.1} parent=1 // pred_region
      %s79 = ssub.s32 16, 16
      %80 = vsyncadd [#allocation9], %s79
      %s82 = sshll.u32 [#allocation8], 4
      %s83 = int_to_ptr.vmem [resolvable:$true] %s82
      %85 = dma.hbm_to_vmem [thread:$0]  %s6, 16, %s83, [#allocation9]
    $region29: #{tpu_custom_call.1} parent=1 // pred_fallthru
      _
    // Predicated region
    $region30: #{tpu_custom_call.1} parent=1 // pred_check
      _
    $region31: #{tpu_custom_call.1} parent=1 // pred_check_branch
      %87 = sbr.rel (0) target = $region33
    $region32: #{tpu_custom_call.1} parent=1 // pred_region
      %s89 = ssub.s32 16, 16
      %90 = vsyncadd [#allocation9], %s89
      %s92 = sshll.u32 [#allocation10], 4
      %s93 = int_to_ptr.vmem [resolvable:$true] %s92
      %95 = dma.hbm_to_vmem [thread:$0]  %s7, 16, %s93, [#allocation9]
    $region33: #{tpu_custom_call.1} parent=1 // pred_fallthru
      _
    // Predicated region
    $region34: #{tpu_custom_call.1} parent=1 // pred_check
      _
    $region35: #{tpu_custom_call.1} parent=1 // pred_check_branch
      %97 = sbr.rel (0) target = $region37
    $region36: #{tpu_custom_call.1} parent=1 // pred_region
      %s99 = ssub.s32 16, 16
      %100 = vsyncadd [#allocation12], %s99
      %s102 = sshll.u32 [#allocation11], 4
      %s103 = int_to_ptr.vmem [resolvable:$true] %s102
      %105 = dma.hbm_to_vmem [thread:$0]  %s8, 16, %s103, [#allocation12]
    $region37: #{tpu_custom_call.1} parent=1 // pred_fallthru
      _
    // Predicated region
    $region38: #{tpu_custom_call.1} parent=1 // pred_check
      _
    $region39: #{tpu_custom_call.1} parent=1 // pred_check_branch
      %107 = sbr.rel (0) target = $region41
    $region40: #{tpu_custom_call.1} parent=1 // pred_region
      _
    $region41: #{tpu_custom_call.1} parent=1 // pred_fallthru
      _
    // Predicated region
    $region42: #{tpu_custom_call.1} parent=1 // pred_check
      _
    $region43: #{tpu_custom_call.1} parent=1 // pred_check_branch
      %109 = sbr.rel (0) target = $region45
    $region44: #{tpu_custom_call.1} parent=1 // pred_region
      %s111 = ssub.s32 16, 16
      %112 = vsyncadd [#allocation12], %s111
      %s114 = sshll.u32 [#allocation13], 4
      %s115 = int_to_ptr.vmem [resolvable:$true] %s114
      %117 = dma.hbm_to_vmem [thread:$0]  %s10, 16, %s115, [#allocation12]
    $region45: #{tpu_custom_call.1} parent=1 // pred_fallthru
      _
    // Predicated region
    $region46: #{tpu_custom_call.1} parent=1 // pred_check
      _
    $region47: #{tpu_custom_call.1} parent=1 // pred_check_branch
      %119 = sbr.rel (0) target = $region49
    $region48: #{tpu_custom_call.1} parent=1 // pred_region
      %s121 = ssub.s32 512, 512
      %122 = vsyncadd [#allocation15], %s121
      %s123 = sshll.u32 [#allocation14], 4
      %s124 = int_to_ptr.vmem [resolvable:$true] %s123
      %129 = dma.hbm_to_vmem [thread:$0]  %s11, 512, %s124, [#allocation15], 128, 128, 8
    $region49: #{tpu_custom_call.1} parent=1 // pred_fallthru
      _
    // Predicated region
    $region50: #{tpu_custom_call.1} parent=1 // pred_check
      _
    $region51: #{tpu_custom_call.1} parent=1 // pred_check_branch
      %131 = sbr.rel (0) target = $region53
    $region52: #{tpu_custom_call.1} parent=1 // pred_region
      %s133 = ssub.s32 16, 16
      %134 = vsyncadd [#allocation15], %s133
      %s136 = sshll.u32 [#allocation16], 4
      %s137 = int_to_ptr.vmem [resolvable:$true] %s136
      %139 = dma.hbm_to_vmem [thread:$0]  %s12, 16, %s137, [#allocation15]
    $region53: #{tpu_custom_call.1} parent=1 // pred_fallthru
      _
    // Predicated region
    $region54: #{tpu_custom_call.1} parent=1 // pred_check
      _
    $region55: #{tpu_custom_call.1} parent=1 // pred_check_branch
      %141 = sbr.rel (0) target = $region57
    $region56: #{tpu_custom_call.1} parent=1 // pred_region
      %s143 = ssub.s32 16, 16
      %144 = vsyncadd [#allocation18], %s143
      %s146 = sshll.u32 [#allocation17], 4
      %s147 = int_to_ptr.vmem [resolvable:$true] %s146
      %149 = dma.hbm_to_vmem [thread:$0]  %s13, 16, %s147, [#allocation18]
    $region57: #{tpu_custom_call.1} parent=1 // pred_fallthru
      _
    // Predicated region
    $region58: #{tpu_custom_call.1} parent=1 // pred_check
      _
    $region59: #{tpu_custom_call.1} parent=1 // pred_check_branch
      %151 = sbr.rel (0) target = $region61
    $region60: #{tpu_custom_call.1} parent=1 // pred_region
      _
    $region61: #{tpu_custom_call.1} parent=1 // pred_fallthru
      _
    // Predicated region
    $region62: #{tpu_custom_call.1} parent=1 // pred_check
      _
    $region63: #{tpu_custom_call.1} parent=1 // pred_check_branch
      %153 = sbr.rel (0) target = $region65
    $region64: #{tpu_custom_call.1} parent=1 // pred_region
      _
    $region65: #{tpu_custom_call.1} parent=1 // pred_fallthru
      _
    // Predicated region
    $region66: #{tpu_custom_call.1} parent=1 // pred_check
      _
    $region67: #{tpu_custom_call.1} parent=1 // pred_check_branch
      %155 = sbr.rel (0) target = $region69
    $region68: #{tpu_custom_call.1} parent=1 // pred_region
      _
    $region69: #{tpu_custom_call.1} parent=1 // pred_fallthru
      _
    // Predicated region
    $region70: #{tpu_custom_call.1} parent=1 // pred_check
      _
    $region71: #{tpu_custom_call.1} parent=1 // pred_check_branch
      %157 = sbr.rel (0) target = $region73
    $region72: #{tpu_custom_call.1} parent=1 // pred_region
      %s159 = ssub.s32 512, 512
      %160 = vsyncadd [#allocation18], %s159
      %s161 = sshll.u32 [#allocation19], 4
      %s162 = int_to_ptr.vmem [resolvable:$true] %s161
      %167 = dma.hbm_to_vmem [thread:$0]  %s17, 512, %s162, [#allocation18], 128, 128, 8
    $region73: #{tpu_custom_call.1} parent=1 // pred_fallthru
      _
    // Predicated region
    $region74: #{tpu_custom_call.1} parent=1 // pred_check
      _
    $region75: #{tpu_custom_call.1} parent=1 // pred_check_branch
      %169 = sbr.rel (0) target = $region77
    $region76: #{tpu_custom_call.1} parent=1 // pred_region
      _
    $region77: #{tpu_custom_call.1} parent=1 // pred_fallthru
      _
    // Predicated region
    $region78: #{tpu_custom_call.1} parent=1 // pred_check
      _
    $region79: #{tpu_custom_call.1} parent=1 // pred_check_branch
      %171 = sbr.rel (0) target = $region81
    $region80: #{tpu_custom_call.1} parent=1 // pred_region
      _
    $region81: #{tpu_custom_call.1} parent=1 // pred_fallthru
      _
    // Predicated region
    $region82: #{tpu_custom_call.1} parent=1 // pred_check
      _
    $region83: #{tpu_custom_call.1} parent=1 // pred_check_branch
      %173 = sbr.rel (0) target = $region85
    $region84: #{tpu_custom_call.1} parent=1 // pred_region
      _
    $region85: #{tpu_custom_call.1} parent=1 // pred_fallthru
      _
    // Predicated region
    $region86: #{tpu_custom_call.1} parent=1 // pred_check
      _
    $region87: #{tpu_custom_call.1} parent=1 // pred_check_branch
      %175 = sbr.rel (0) target = $region89
    $region88: #{tpu_custom_call.1} parent=1 // pred_region
      %176 = dma.done [#allocation3], 256
    $region89: #{tpu_custom_call.1} parent=1 // pred_fallthru
      _
    // Predicated region
    $region90: #{tpu_custom_call.1} parent=1 // pred_check
      _
    $region91: #{tpu_custom_call.1} parent=1 // pred_check_branch
      %178 = sbr.rel (0) target = $region93
    $region92: #{tpu_custom_call.1} parent=1 // pred_region
      %179 = dma.done [#allocation6], 32
    $region93: #{tpu_custom_call.1} parent=1 // pred_fallthru
      _
    // Predicated region
    $region94: #{tpu_custom_call.1} parent=1 // pred_check
      _
    $region95: #{tpu_custom_call.1} parent=1 // pred_check_branch
      %181 = sbr.rel (0) target = $region97
    $region96: #{tpu_custom_call.1} parent=1 // pred_region
      %182 = dma.done [#allocation6], 256
    $region97: #{tpu_custom_call.1} parent=1 // pred_fallthru
      _
    // Predicated region
    $region98: #{tpu_custom_call.1} parent=1 // pred_check
      _
    $region99: #{tpu_custom_call.1} parent=1 // pred_check_branch
      %184 = sbr.rel (0) target = $region101
    $region100: #{tpu_custom_call.1} parent=1 // pred_region
      %185 = dma.done [#allocation9], 16
    $region101: #{tpu_custom_call.1} parent=1 // pred_fallthru
      _
    // Predicated region
    $region102: #{tpu_custom_call.1} parent=1 // pred_check
      _
    $region103: #{tpu_custom_call.1} parent=1 // pred_check_branch
      %187 = sbr.rel (0) target = $region105
    $region104: #{tpu_custom_call.1} parent=1 // pred_region
      %188 = dma.done [#allocation9], 16
    $region105: #{tpu_custom_call.1} parent=1 // pred_fallthru
      _
    // Predicated region
    $region106: #{tpu_custom_call.1} parent=1 // pred_check
      _
    $region107: #{tpu_custom_call.1} parent=1 // pred_check_branch
      %190 = sbr.rel (0) target = $region109
    $region108: #{tpu_custom_call.1} parent=1 // pred_region
      %191 = dma.done [#allocation12], 16
    $region109: #{tpu_custom_call.1} parent=1 // pred_fallthru
      _
    // Predicated region
    $region110: #{tpu_custom_call.1} parent=1 // pred_check
      _
    $region111: #{tpu_custom_call.1} parent=1 // pred_check_branch
      %193 = sbr.rel (0) target = $region113
    $region112: #{tpu_custom_call.1} parent=1 // pred_region
      %194 = dma.done [#allocation12], 16
    $region113: #{tpu_custom_call.1} parent=1 // pred_fallthru
      _
    // Predicated region
    $region114: #{tpu_custom_call.1} parent=1 // pred_check
      _
    $region115: #{tpu_custom_call.1} parent=1 // pred_check_branch
      %196 = sbr.rel (0) target = $region117
    $region116: #{tpu_custom_call.1} parent=1 // pred_region
      %197 = dma.done [#allocation15], 512
    $region117: #{tpu_custom_call.1} parent=1 // pred_fallthru
      _
    // Predicated region
    $region118: #{tpu_custom_call.1} parent=1 // pred_check
      _
    $region119: #{tpu_custom_call.1} parent=1 // pred_check_branch
      %199 = sbr.rel (0) target = $region121
    $region120: #{tpu_custom_call.1} parent=1 // pred_region
      %200 = dma.done [#allocation15], 16
    $region121: #{tpu_custom_call.1} parent=1 // pred_fallthru
      _
    // Predicated region
    $region122: #{tpu_custom_call.1} parent=1 // pred_check
      _
    $region123: #{tpu_custom_call.1} parent=1 // pred_check_branch
      %202 = sbr.rel (0) target = $region125
    $region124: #{tpu_custom_call.1} parent=1 // pred_region
      %203 = dma.done [#allocation18], 16
    $region125: #{tpu_custom_call.1} parent=1 // pred_fallthru
      _
    // Predicated region
    $region126: #{tpu_custom_call.1} parent=1 // pred_check
      _
    $region127: #{tpu_custom_call.1} parent=1 // pred_check_branch
      %205 = sbr.rel (0) target = $region129
    $region128: #{tpu_custom_call.1} parent=1 // pred_region
      %206 = dma.done [#allocation18], 512
    $region129: #{tpu_custom_call.1} parent=1 // pred_fallthru
      _
    %v208 = vld [vmem:[#allocation2] sm:$0xf]
    %v209 = vld [vmem:[#allocation2 + $0x4] sm:$0xf]
    %v210 = vld [vmem:[#allocation2 + $0x8] sm:$0xf]
    %v211 = vld [vmem:[#allocation2 + $0xc] sm:$0xf]
    %v212 = vld [vmem:[#allocation5] sm:$0x3]
    %v213 = vld [vmem:[%s1] sm:$0xff]
    %v214 = vld [vmem:[%s1 + $0x8] sm:$0xff]
    %v215 = vld [vmem:[%s1 + $0x10] sm:$0xff]
    %v216 = vld [vmem:[%s1 + $0x18] sm:$0xff]
    %v217 = vpack.c.bf16 %v214, %v213
    %v218 = vpack.c.bf16 %v216, %v215
    %v223 = vunpack.c.l.b16 %v208
    %v224 = vunpack.c.l.b16 %v209
    %v225 = vunpack.c.l.b16 %v210
    %v226 = vunpack.c.l.b16 %v211
    %v227 = vpack.c.b16 %v224, %v223
    %v228 = vpack.c.b16 %v226, %v225
    %vm229 = vcmask 261120
    %v231 = vsel %vm229, %v227, 0
    %v234 = vsel %vm229, %v228, 0
    %236 = vmatprep.subr.bf16.mxu0 0
    %237 = vmatpush1.bf16.msra.mxu0 %v217
    %238 = vmatprep.subr.bf16.mxu0 0
    %239 = vmatpush1.bf16.msra.mxu0 %v218
    %240 = vmatprep.subr.bf16.mxu0 0
    %241 = vmatpush1.bf16.msra.mxu0 0
    %242 = vmatprep.subr.bf16.mxu0 0
    %243 = vmatpush1.bf16.msra.mxu0 0
    %244 = vmatprep.subr.bf16.mxu0 0
    %245 = vmatpush1.bf16.msra.mxu0 0
    %246 = vmatprep.subr.bf16.mxu0 0
    %247 = vmatpush1.bf16.msra.mxu0 0
    %248 = vmatprep.subr.bf16.mxu0 0
    %249 = vmatpush1.bf16.msra.mxu0 0
    %250 = vmatprep.subr.bf16.mxu0 0
    %251 = vmatpush1.bf16.msra.mxu0 0
    %252 = vmatprep.subr.bf16.mxu0 0
    %253 = vmatpush1.bf16.msra.mxu0 0
    %254 = vmatprep.subr.bf16.mxu0 0
    %255 = vmatpush1.bf16.msra.mxu0 0
    %256 = vmatprep.subr.bf16.mxu0 0
    %257 = vmatpush1.bf16.msra.mxu0 0
    %258 = vmatprep.subr.bf16.mxu0 0
    %259 = vmatpush1.bf16.msra.mxu0 0
    %260 = vmatprep.subr.bf16.mxu0 0
    %261 = vmatpush1.bf16.msra.mxu0 0
    %262 = vmatprep.subr.bf16.mxu0 0
    %263 = vmatpush1.bf16.msra.mxu0 0
    %264 = vmatprep.subr.bf16.mxu0 0
    %265 = vmatpush1.bf16.msra.mxu0 0
    %266 = vmatprep.subr.bf16.mxu0 0
    %267 = vmatpush1.bf16.msra.mxu0 0
    %268 = vmatprep.mubr.bf16.mxu0 0
    %269 = vmatmul.mubr.bf16.gmra.mrb[0].mxu0 %v231
    %v270 = vpop.f32.mrb[0].mxu0
    %v271 = vadd.f32 0.0, %v270
    %v272 = vpop.f32.mrb[0].mxu0
    %v273 = vpop.f32.mrb[0].mxu0
    %v274 = vadd.f32 0.0, %v273
    %v275 = vpop.f32.mrb[0].mxu0
    %276 = vmatprep.mubr.bf16.mxu0 0
    %277 = vmatmul.mubr.bf16.gmra.mrb[0].mxu0 %v234
    %v278 = vpop.f32.mrb[0].mxu0
    %v279 = vadd.f32 0.0, %v278
    %v280 = vpop.f32.mrb[0].mxu0
    %v281 = vpop.f32.mrb[0].mxu0
    %v282 = vadd.f32 0.0, %v281
    %v283 = vpop.f32.mrb[0].mxu0
    %284 = vdwg.mxu0
    %v285 = vadd.f32 %v213, %v271
    %v286 = vadd.f32 %v214, %v274
    %v287 = vadd.f32 %v215, %v279
    %v288 = vadd.f32 %v216, %v282
    %v289 = vld [vmem:[#allocation7] sm:$0xff]
    %v290 = vld [vmem:[#allocation7 + $0x8] sm:$0xff]
    %v291 = vld [vmem:[%s4] sm:$0x1]
    %v293 = vlaneseq
    %v294 = vshrl.u32 %v293, 7
    %v295 = vsub.s32 0, %v294
    %v296 = vrot.slane %v291, %v295
    %vm298 = vcmask 130048
    %v300 = vsel %vm298, %v285, 0
    %v303 = vsel %vm298, %v286, 0
    %v306 = vsel %vm298, %v287, 0
    %v309 = vsel %vm298, %v288, 0
    %311 = vmatprep.subr.mxu0 0.0
    %312 = vmatpush1.msra.mxu0 %v289
    %313 = vmatprep.subr.mxu0 0.0
    %314 = vmatpush1.msra.mxu0 %v290
    %315 = vmatprep.subr.mxu0 0.0
    %316 = vmatpush1.msra.mxu0 0.0
    %317 = vmatprep.subr.mxu0 0.0
    %318 = vmatpush1.msra.mxu0 0.0
    %319 = vmatprep.subr.mxu0 0.0
    %320 = vmatpush1.msra.mxu0 0.0
    %321 = vmatprep.subr.mxu0 0.0
    %322 = vmatpush1.msra.mxu0 0.0
    %323 = vmatprep.subr.mxu0 0.0
    %324 = vmatpush1.msra.mxu0 0.0
    %325 = vmatprep.subr.mxu0 0.0
    %326 = vmatpush1.msra.mxu0 0.0
    %327 = vmatprep.subr.mxu0 0.0
    %328 = vmatpush1.msra.mxu0 0.0
    %329 = vmatprep.subr.mxu0 0.0
    %330 = vmatpush1.msra.mxu0 0.0
    %331 = vmatprep.subr.mxu0 0.0
    %332 = vmatpush1.msra.mxu0 0.0
    %333 = vmatprep.subr.mxu0 0.0
    %334 = vmatpush1.msra.mxu0 0.0
    %335 = vmatprep.subr.mxu0 0.0
    %336 = vmatpush1.msra.mxu0 0.0
    %337 = vmatprep.subr.mxu0 0.0
    %338 = vmatpush1.msra.mxu0 0.0
    %339 = vmatprep.subr.mxu0 0.0
    %340 = vmatpush1.msra.mxu0 0.0
    %341 = vmatprep.subr.mxu0 0.0
    %342 = vmatpush1.msra.mxu0 0.0
    %343 = vmatprep.subr.mxu0 0.0
    %344 = vmatpush1.msra.mxu0 0.0
    %345 = vmatprep.subr.mxu0 0.0
    %346 = vmatpush1.msra.mxu0 0.0
    %347 = vmatprep.subr.mxu0 0.0
    %348 = vmatpush1.msra.mxu0 0.0
    %349 = vmatprep.subr.mxu0 0.0
    %350 = vmatpush1.msra.mxu0 0.0
    %351 = vmatprep.subr.mxu0 0.0
    %352 = vmatpush1.msra.mxu0 0.0
    %353 = vmatprep.subr.mxu0 0.0
    %354 = vmatpush1.msra.mxu0 0.0
    %355 = vmatprep.subr.mxu0 0.0
    %356 = vmatpush1.msra.mxu0 0.0
    %357 = vmatprep.subr.mxu0 0.0
    %358 = vmatpush1.msra.mxu0 0.0
    %359 = vmatprep.subr.mxu0 0.0
    %360 = vmatpush1.msra.mxu0 0.0
    %361 = vmatprep.subr.mxu0 0.0
    %362 = vmatpush1.msra.mxu0 0.0
    %363 = vmatprep.subr.mxu0 0.0
    %364 = vmatpush1.msra.mxu0 0.0
    %365 = vmatprep.subr.mxu0 0.0
    %366 = vmatpush1.msra.mxu0 0.0
    %367 = vmatprep.subr.mxu0 0.0
    %368 = vmatpush1.msra.mxu0 0.0
    %369 = vmatprep.subr.mxu0 0.0
    %370 = vmatpush1.msra.mxu0 0.0
    %371 = vmatprep.subr.mxu0 0.0
    %372 = vmatpush1.msra.mxu0 0.0
    %373 = vmatprep.subr.mxu0 0.0
    %374 = vmatpush1.msra.mxu0 0.0
    %375 = vmatprep.mubr.f32.mxu0 0.0
    %376 = vmatmul.mubr.f32.gmra.mrb[0].mxu0 %v300
    %v377 = vpop.f32.mrb[0].mxu0
    %v378 = vadd.f32 %v296, %v377
    %v379 = vpop.f32.mrb[0].mxu0
    %380 = vmatprep.mubr.f32.mxu0 0.0
    %381 = vmatmul.mubr.f32.gmra.mrb[0].mxu0 %v303
    %v382 = vpop.f32.mrb[0].mxu0
    %v383 = vadd.f32 %v296, %v382
    %v384 = vpop.f32.mrb[0].mxu0
    %385 = vmatprep.mubr.f32.mxu0 0.0
    %386 = vmatmul.mubr.f32.gmra.mrb[0].mxu0 %v306
    %v387 = vpop.f32.mrb[0].mxu0
    %v388 = vadd.f32 %v296, %v387
    %v389 = vpop.f32.mrb[0].mxu0
    %390 = vmatprep.mubr.f32.mxu0 0.0
    %391 = vmatmul.mubr.f32.gmra.mrb[0].mxu0 %v309
    %v392 = vpop.f32.mrb[0].mxu0
    %v393 = vadd.f32 %v296, %v392
    %v394 = vpop.f32.mrb[0].mxu0
    %395 = vdwg.mxu0
    %v396 = vmax.f32 %v378, 0.0
    %v397 = vmax.f32 %v383, 0.0
    %v398 = vmax.f32 %v388, 0.0
    %v399 = vmax.f32 %v393, 0.0
    %v400 = vld [vmem:[%s5] sm:$0xff]
    %v401 = vld [vmem:[%s5 + $0x8] sm:$0xff]
    %v402 = vld [vmem:[%s5 + $0x10] sm:$0xff]
    %v403 = vld [vmem:[%s5 + $0x18] sm:$0xff]
    %v404 = vld [vmem:[#allocation8] sm:$0x1]
    %v406 = vlaneseq
    %v407 = vshrl.u32 %v406, 7
    %v408 = vsub.s32 0, %v407
    %v409 = vrot.slane %v404, %v408
    %v412 = vsel %vm229, %v396, 0
    %v415 = vsel %vm229, %v397, 0
    %v418 = vsel %vm229, %v398, 0
    %v421 = vsel %vm229, %v399, 0
    %423 = vmatprep.subr.mxu0 0.0
    %424 = vmatpush1.msra.mxu0 %v400
    %425 = vmatprep.subr.mxu0 0.0
    %426 = vmatpush1.msra.mxu0 %v401
    %427 = vmatprep.subr.mxu0 0.0
    %428 = vmatpush1.msra.mxu0 %v402
    %429 = vmatprep.subr.mxu0 0.0
    %430 = vmatpush1.msra.mxu0 %v403
    %431 = vmatprep.subr.mxu0 0.0
    %432 = vmatpush1.msra.mxu0 0.0
    %433 = vmatprep.subr.mxu0 0.0
    %434 = vmatpush1.msra.mxu0 0.0
    %435 = vmatprep.subr.mxu0 0.0
    %436 = vmatpush1.msra.mxu0 0.0
    %437 = vmatprep.subr.mxu0 0.0
    %438 = vmatpush1.msra.mxu0 0.0
    %439 = vmatprep.subr.mxu0 0.0
    %440 = vmatpush1.msra.mxu0 0.0
    %441 = vmatprep.subr.mxu0 0.0
    %442 = vmatpush1.msra.mxu0 0.0
    %443 = vmatprep.subr.mxu0 0.0
    %444 = vmatpush1.msra.mxu0 0.0
    %445 = vmatprep.subr.mxu0 0.0
    %446 = vmatpush1.msra.mxu0 0.0
    %447 = vmatprep.subr.mxu0 0.0
    %448 = vmatpush1.msra.mxu0 0.0
    %449 = vmatprep.subr.mxu0 0.0
    %450 = vmatpush1.msra.mxu0 0.0
    %451 = vmatprep.subr.mxu0 0.0
    %452 = vmatpush1.msra.mxu0 0.0
    %453 = vmatprep.subr.mxu0 0.0
    %454 = vmatpush1.msra.mxu0 0.0
    %455 = vmatprep.subr.mxu0 0.0
    %456 = vmatpush1.msra.mxu0 0.0
    %457 = vmatprep.subr.mxu0 0.0
    %458 = vmatpush1.msra.mxu0 0.0
    %459 = vmatprep.subr.mxu0 0.0
    %460 = vmatpush1.msra.mxu0 0.0
    %461 = vmatprep.subr.mxu0 0.0
    %462 = vmatpush1.msra.mxu0 0.0
    %463 = vmatprep.subr.mxu0 0.0
    %464 = vmatpush1.msra.mxu0 0.0
    %465 = vmatprep.subr.mxu0 0.0
    %466 = vmatpush1.msra.mxu0 0.0
    %467 = vmatprep.subr.mxu0 0.0
    %468 = vmatpush1.msra.mxu0 0.0
    %469 = vmatprep.subr.mxu0 0.0
    %470 = vmatpush1.msra.mxu0 0.0
    %471 = vmatprep.subr.mxu0 0.0
    %472 = vmatpush1.msra.mxu0 0.0
    %473 = vmatprep.subr.mxu0 0.0
    %474 = vmatpush1.msra.mxu0 0.0
    %475 = vmatprep.subr.mxu0 0.0
    %476 = vmatpush1.msra.mxu0 0.0
    %477 = vmatprep.subr.mxu0 0.0
    %478 = vmatpush1.msra.mxu0 0.0
    %479 = vmatprep.subr.mxu0 0.0
    %480 = vmatpush1.msra.mxu0 0.0
    %481 = vmatprep.subr.mxu0 0.0
    %482 = vmatpush1.msra.mxu0 0.0
    %483 = vmatprep.subr.mxu0 0.0
    %484 = vmatpush1.msra.mxu0 0.0
    %485 = vmatprep.subr.mxu0 0.0
    %486 = vmatpush1.msra.mxu0 0.0
    %487 = vmatprep.mubr.f32.mxu0 0.0
    %488 = vmatmul.mubr.f32.gmra.mrb[0].mxu0 %v412
    %v489 = vpop.f32.mrb[0].mxu0
    %v490 = vadd.f32 %v409, %v489
    %v491 = vpop.f32.mrb[0].mxu0
    %492 = vmatprep.mubr.f32.mxu0 0.0
    %493 = vmatmul.mubr.f32.gmra.mrb[0].mxu0 %v415
    %v494 = vpop.f32.mrb[0].mxu0
    %v495 = vadd.f32 %v409, %v494
    %v496 = vpop.f32.mrb[0].mxu0
    %497 = vmatprep.mubr.f32.mxu0 0.0
    %498 = vmatmul.mubr.f32.gmra.mrb[0].mxu0 %v418
    %v499 = vpop.f32.mrb[0].mxu0
    %v500 = vadd.f32 %v409, %v499
    %v501 = vpop.f32.mrb[0].mxu0
    %502 = vmatprep.mubr.f32.mxu0 0.0
    %503 = vmatmul.mubr.f32.gmra.mrb[0].mxu0 %v421
    %v504 = vpop.f32.mrb[0].mxu0
    %v505 = vadd.f32 %v409, %v504
    %v506 = vpop.f32.mrb[0].mxu0
    %507 = vdwg.mxu0
    %v508 = vmax.f32 %v490, 0.0
    %v509 = vmax.f32 %v495, 0.0
    %v510 = vmax.f32 %v500, 0.0
    %v511 = vmax.f32 %v505, 0.0
    %v512 = vsel %vm229, %v508, 0.0
    %v513 = vsel %vm229, %v509, 0.0
    %v514 = vadd.f32 %v512, %v513
    %v515 = vsel %vm229, %v510, 0.0
    %v516 = vadd.f32 %v514, %v515
    %v517 = vsel %vm229, %v511, 0.0
    %v518 = vadd.f32 %v516, %v517
    %v519 = vrot.slane %v518, 4
    %v520 = vadd.f32 %v518, %v519
    %v521 = vrot.slane %v520, 2
    %v522 = vadd.f32 %v520, %v521
    %v523 = vrot.slane %v522, 1
    %v524 = vadd.f32 %v522, %v523
    %v525 = vmul.f32 %v524, 0.03125
    %v526 = vmul.f32 %v508, %v508
    %v527 = vmul.f32 %v509, %v509
    %v528 = vmul.f32 %v510, %v510
    %v529 = vmul.f32 %v511, %v511
    %v530 = vsel %vm229, %v526, 0.0
    %v531 = vsel %vm229, %v527, 0.0
    %v532 = vadd.f32 %v530, %v531
    %v533 = vsel %vm229, %v528, 0.0
    %v534 = vadd.f32 %v532, %v533
    %v535 = vsel %vm229, %v529, 0.0
    %v536 = vadd.f32 %v534, %v535
    %v537 = vrot.slane %v536, 4
    %v538 = vadd.f32 %v536, %v537
    %v539 = vrot.slane %v538, 2
    %v540 = vadd.f32 %v538, %v539
    %v541 = vrot.slane %v540, 1
    %v542 = vadd.f32 %v540, %v541
    %v543 = vmul.f32 %v542, 0.03125
    %v544 = vmul.f32 %v525, %v525
    %v545 = vsub.f32 %v543, %v544
    %v546 = vmax.f32 %v545, 0.0
    %v547 = vld [vmem:[#allocation10] sm:$0x1]
    %v548 = vadd.f32 %v546, 1e-05
    %v549 = vrsqrt.pop %v548
    %v550 = vmul.f32 %v547, %v549
    %v551 = vld [vmem:[#allocation11] sm:$0x1]
    %v552 = vmul.f32 %v525, %v550
    %v553 = vsub.f32 %v551, %v552
    %v555 = vlaneseq
    %v556 = vshrl.u32 %v555, 7
    %v557 = vsub.s32 0, %v556
    %v558 = vrot.slane %v550, %v557
    %v560 = vmul.f32 %v508, %v558
    %v561 = vmul.f32 %v509, %v558
    %v562 = vmul.f32 %v510, %v558
    %v563 = vmul.f32 %v511, %v558
    %v565 = vlaneseq
    %v566 = vshrl.u32 %v565, 7
    %v567 = vsub.s32 0, %v566
    %v568 = vrot.slane %v553, %v567
    %v570 = vadd.f32 %v560, %v568
    %v571 = vadd.f32 %v561, %v568
    %v572 = vadd.f32 %v562, %v568
    %v573 = vadd.f32 %v563, %v568
    %574 = vst.msk [vmem:[#allocation21] sm:$0xff] %vm229, %v570
    %575 = vst.msk [vmem:[#allocation21 + $0x8] sm:$0xff] %vm229, %v571
    %576 = vst.msk [vmem:[#allocation21 + $0x10] sm:$0xff] %vm229, %v572
    %577 = vst.msk [vmem:[#allocation21 + $0x18] sm:$0xff] %vm229, %v573
    %v579 = vsel %vm229, %v212, 0
    %581 = vmatprep.subr.mxu0 0.0
    %582 = vmatpush1.msra.mxu0 %v570
    %583 = vmatprep.subr.mxu0 0.0
    %584 = vmatpush1.msra.mxu0 %v571
    %585 = vmatprep.subr.mxu0 0.0
    %586 = vmatpush1.msra.mxu0 %v572
    %587 = vmatprep.subr.mxu0 0.0
    %588 = vmatpush1.msra.mxu0 %v573
    %589 = vmatprep.subr.mxu0 0.0
    %590 = vmatpush1.msra.mxu0 0.0
    %591 = vmatprep.subr.mxu0 0.0
    %592 = vmatpush1.msra.mxu0 0.0
    %593 = vmatprep.subr.mxu0 0.0
    %594 = vmatpush1.msra.mxu0 0.0
    %595 = vmatprep.subr.mxu0 0.0
    %596 = vmatpush1.msra.mxu0 0.0
    %597 = vmatprep.subr.mxu0 0.0
    %598 = vmatpush1.msra.mxu0 0.0
    %599 = vmatprep.subr.mxu0 0.0
    %600 = vmatpush1.msra.mxu0 0.0
    %601 = vmatprep.subr.mxu0 0.0
    %602 = vmatpush1.msra.mxu0 0.0
    %603 = vmatprep.subr.mxu0 0.0
    %604 = vmatpush1.msra.mxu0 0.0
    %605 = vmatprep.subr.mxu0 0.0
    %606 = vmatpush1.msra.mxu0 0.0
    %607 = vmatprep.subr.mxu0 0.0
    %608 = vmatpush1.msra.mxu0 0.0
    %609 = vmatprep.subr.mxu0 0.0
    %610 = vmatpush1.msra.mxu0 0.0
    %611 = vmatprep.subr.mxu0 0.0
    %612 = vmatpush1.msra.mxu0 0.0
    %613 = vmatprep.subr.mxu0 0.0
    %614 = vmatpush1.msra.mxu0 0.0
    %615 = vmatprep.subr.mxu0 0.0
    %616 = vmatpush1.msra.mxu0 0.0
    %617 = vmatprep.subr.mxu0 0.0
    %618 = vmatpush1.msra.mxu0 0.0
    %619 = vmatprep.subr.mxu0 0.0
    %620 = vmatpush1.msra.mxu0 0.0
    %621 = vmatprep.subr.mxu0 0.0
    %622 = vmatpush1.msra.mxu0 0.0
    %623 = vmatprep.subr.mxu0 0.0
    %624 = vmatpush1.msra.mxu0 0.0
    %625 = vmatprep.subr.mxu0 0.0
    %626 = vmatpush1.msra.mxu0 0.0
    %627 = vmatprep.subr.mxu0 0.0
    %628 = vmatpush1.msra.mxu0 0.0
    %629 = vmatprep.subr.mxu0 0.0
    %630 = vmatpush1.msra.mxu0 0.0
    %631 = vmatprep.subr.mxu0 0.0
    %632 = vmatpush1.msra.mxu0 0.0
    %633 = vmatprep.subr.mxu0 0.0
    %634 = vmatpush1.msra.mxu0 0.0
    %635 = vmatprep.subr.mxu0 0.0
    %636 = vmatpush1.msra.mxu0 0.0
    %637 = vmatprep.subr.mxu0 0.0
    %638 = vmatpush1.msra.mxu0 0.0
    %639 = vmatprep.subr.mxu0 0.0
    %640 = vmatpush1.msra.mxu0 0.0
    %641 = vmatprep.subr.mxu0 0.0
    %642 = vmatpush1.msra.mxu0 0.0
    %643 = vmatprep.subr.mxu0 0.0
    %644 = vmatpush1.msra.mxu0 0.0
    %645 = vmatprep.mubr.f32.mxu0 0.0
    %646 = vmatmul.mubr.f32.gmra.mrb[0].mxu0 %v579
    %v647 = vpop.f32.mrb[0].mxu0
    %v648 = vadd.f32 0.0, %v647
    %v649 = vpop.f32.mrb[0].mxu0
    %650 = vdwg.mxu0
    %vm651 = vcmask 254976
    %652 = vst.msk [vmem:[#allocation20] sm:$0x3] %vm651, %v648
    %v653 = vpack.c.bf16 %v571, %v570
    %v654 = vpack.c.bf16 %v573, %v572
    %655 = vmatprep.subr.bf16.mxu0 0
    %656 = vmatpush1.bf16.msra.mxu0 %v653
    %657 = vmatprep.subr.bf16.mxu0 0
    %658 = vmatpush1.bf16.msra.mxu0 %v654
    %659 = vmatprep.subr.bf16.mxu0 0
    %660 = vmatpush1.bf16.msra.mxu0 0
    %661 = vmatprep.subr.bf16.mxu0 0
    %662 = vmatpush1.bf16.msra.mxu0 0
    %663 = vmatprep.subr.bf16.mxu0 0
    %664 = vmatpush1.bf16.msra.mxu0 0
    %665 = vmatprep.subr.bf16.mxu0 0
    %666 = vmatpush1.bf16.msra.mxu0 0
    %667 = vmatprep.subr.bf16.mxu0 0
    %668 = vmatpush1.bf16.msra.mxu0 0
    %669 = vmatprep.subr.bf16.mxu0 0
    %670 = vmatpush1.bf16.msra.mxu0 0
    %671 = vmatprep.subr.bf16.mxu0 0
    %672 = vmatpush1.bf16.msra.mxu0 0
    %673 = vmatprep.subr.bf16.mxu0 0
    %674 = vmatpush1.bf16.msra.mxu0 0
    %675 = vmatprep.subr.bf16.mxu0 0
    %676 = vmatpush1.bf16.msra.mxu0 0
    %677 = vmatprep.subr.bf16.mxu0 0
    %678 = vmatpush1.bf16.msra.mxu0 0
    %679 = vmatprep.subr.bf16.mxu0 0
    %680 = vmatpush1.bf16.msra.mxu0 0
    %681 = vmatprep.subr.bf16.mxu0 0
    %682 = vmatpush1.bf16.msra.mxu0 0
    %683 = vmatprep.subr.bf16.mxu0 0
    %684 = vmatpush1.bf16.msra.mxu0 0
    %685 = vmatprep.subr.bf16.mxu0 0
    %686 = vmatpush1.bf16.msra.mxu0 0
    %687 = vmatprep.mubr.bf16.mxu0 0
    %688 = vmatmul.mubr.bf16.gmra.mrb[0].mxu0 %v231
    %v689 = vpop.f32.mrb[0].mxu0
    %v690 = vadd.f32 0.0, %v689
    %v691 = vpop.f32.mrb[0].mxu0
    %v692 = vpop.f32.mrb[0].mxu0
    %v693 = vadd.f32 0.0, %v692
    %v694 = vpop.f32.mrb[0].mxu0
    %695 = vmatprep.mubr.bf16.mxu0 0
    %696 = vmatmul.mubr.bf16.gmra.mrb[0].mxu0 %v234
    %v697 = vpop.f32.mrb[0].mxu0
    %v698 = vadd.f32 0.0, %v697
    %v699 = vpop.f32.mrb[0].mxu0
    %v700 = vpop.f32.mrb[0].mxu0
    %v701 = vadd.f32 0.0, %v700
    %v702 = vpop.f32.mrb[0].mxu0
    %703 = vdwg.mxu0
    %v704 = vadd.f32 %v570, %v690
    %v705 = vadd.f32 %v571, %v693
    %v706 = vadd.f32 %v572, %v698
    %v707 = vadd.f32 %v573, %v701
    %v708 = vld [vmem:[%s9] sm:$0xff]
    %v709 = vld [vmem:[%s9 + $0x8] sm:$0xff]
    %v710 = vld [vmem:[%s9 + $0x10] sm:$0xff]
    %v711 = vld [vmem:[%s9 + $0x18] sm:$0xff]
    %v712 = vld [vmem:[#allocation13] sm:$0x1]
    %v714 = vlaneseq
    %v715 = vshrl.u32 %v714, 7
    %v716 = vsub.s32 0, %v715
    %v717 = vrot.slane %v712, %v716
    %v720 = vsel %vm229, %v704, 0
    %v723 = vsel %vm229, %v705, 0
    %v726 = vsel %vm229, %v706, 0
    %v729 = vsel %vm229, %v707, 0
    %731 = vmatprep.subr.mxu0 0.0
    %732 = vmatpush1.msra.mxu0 %v708
    %733 = vmatprep.subr.mxu0 0.0
    %734 = vmatpush1.msra.mxu0 %v709
    %735 = vmatprep.subr.mxu0 0.0
    %736 = vmatpush1.msra.mxu0 %v710
    %737 = vmatprep.subr.mxu0 0.0
    %738 = vmatpush1.msra.mxu0 %v711
    %739 = vmatprep.subr.mxu0 0.0
    %740 = vmatpush1.msra.mxu0 0.0
    %741 = vmatprep.subr.mxu0 0.0
    %742 = vmatpush1.msra.mxu0 0.0
    %743 = vmatprep.subr.mxu0 0.0
    %744 = vmatpush1.msra.mxu0 0.0
    %745 = vmatprep.subr.mxu0 0.0
    %746 = vmatpush1.msra.mxu0 0.0
    %747 = vmatprep.subr.mxu0 0.0
    %748 = vmatpush1.msra.mxu0 0.0
    %749 = vmatprep.subr.mxu0 0.0
    %750 = vmatpush1.msra.mxu0 0.0
    %751 = vmatprep.subr.mxu0 0.0
    %752 = vmatpush1.msra.mxu0 0.0
    %753 = vmatprep.subr.mxu0 0.0
    %754 = vmatpush1.msra.mxu0 0.0
    %755 = vmatprep.subr.mxu0 0.0
    %756 = vmatpush1.msra.mxu0 0.0
    %757 = vmatprep.subr.mxu0 0.0
    %758 = vmatpush1.msra.mxu0 0.0
    %759 = vmatprep.subr.mxu0 0.0
    %760 = vmatpush1.msra.mxu0 0.0
    %761 = vmatprep.subr.mxu0 0.0
    %762 = vmatpush1.msra.mxu0 0.0
    %763 = vmatprep.subr.mxu0 0.0
    %764 = vmatpush1.msra.mxu0 0.0
    %765 = vmatprep.subr.mxu0 0.0
    %766 = vmatpush1.msra.mxu0 0.0
    %767 = vmatprep.subr.mxu0 0.0
    %768 = vmatpush1.msra.mxu0 0.0
    %769 = vmatprep.subr.mxu0 0.0
    %770 = vmatpush1.msra.mxu0 0.0
    %771 = vmatprep.subr.mxu0 0.0
    %772 = vmatpush1.msra.mxu0 0.0
    %773 = vmatprep.subr.mxu0 0.0
    %774 = vmatpush1.msra.mxu0 0.0
    %775 = vmatprep.subr.mxu0 0.0
    %776 = vmatpush1.msra.mxu0 0.0
    %777 = vmatprep.subr.mxu0 0.0
    %778 = vmatpush1.msra.mxu0 0.0
    %779 = vmatprep.subr.mxu0 0.0
    %780 = vmatpush1.msra.mxu0 0.0
    %781 = vmatprep.subr.mxu0 0.0
    %782 = vmatpush1.msra.mxu0 0.0
    %783 = vmatprep.subr.mxu0 0.0
    %784 = vmatpush1.msra.mxu0 0.0
    %785 = vmatprep.subr.mxu0 0.0
    %786 = vmatpush1.msra.mxu0 0.0
    %787 = vmatprep.subr.mxu0 0.0
    %788 = vmatpush1.msra.mxu0 0.0
    %789 = vmatprep.subr.mxu0 0.0
    %790 = vmatpush1.msra.mxu0 0.0
    %791 = vmatprep.subr.mxu0 0.0
    %792 = vmatpush1.msra.mxu0 0.0
    %793 = vmatprep.subr.mxu0 0.0
    %794 = vmatpush1.msra.mxu0 0.0
    %795 = vmatprep.mubr.f32.mxu0 0.0
    %796 = vmatmul.mubr.f32.gmra.mrb[0].mxu0 %v720
    %v797 = vpop.f32.mrb[0].mxu0
    %v798 = vadd.f32 %v717, %v797
    %v799 = vpop.f32.mrb[0].mxu0
    %800 = vmatprep.mubr.f32.mxu0 0.0
    %801 = vmatmul.mubr.f32.gmra.mrb[0].mxu0 %v723
    %v802 = vpop.f32.mrb[0].mxu0
    %v803 = vadd.f32 %v717, %v802
    %v804 = vpop.f32.mrb[0].mxu0
    %805 = vmatprep.mubr.f32.mxu0 0.0
    %806 = vmatmul.mubr.f32.gmra.mrb[0].mxu0 %v726
    %v807 = vpop.f32.mrb[0].mxu0
    %v808 = vadd.f32 %v717, %v807
    %v809 = vpop.f32.mrb[0].mxu0
    %810 = vmatprep.mubr.f32.mxu0 0.0
    %811 = vmatmul.mubr.f32.gmra.mrb[0].mxu0 %v729
    %v812 = vpop.f32.mrb[0].mxu0
    %v813 = vadd.f32 %v717, %v812
    %v814 = vpop.f32.mrb[0].mxu0
    %815 = vdwg.mxu0
    %v816 = vmax.f32 %v798, 0.0
    %v817 = vmax.f32 %v803, 0.0
    %v818 = vmax.f32 %v808, 0.0
    %v819 = vmax.f32 %v813, 0.0
    %v820 = vld [vmem:[#allocation14] sm:$0xff]
    %v821 = vld [vmem:[#allocation14 + $0x8] sm:$0xff]
    %v822 = vld [vmem:[#allocation14 + $0x10] sm:$0xff]
    %v823 = vld [vmem:[#allocation14 + $0x18] sm:$0xff]
    %v824 = vld [vmem:[#allocation16] sm:$0x1]
    %v826 = vlaneseq
    %v827 = vshrl.u32 %v826, 7
    %v828 = vsub.s32 0, %v827
    %v829 = vrot.slane %v824, %v828
    %v832 = vsel %vm229, %v816, 0
    %v835 = vsel %vm229, %v817, 0
    %v838 = vsel %vm229, %v818, 0
    %v841 = vsel %vm229, %v819, 0
    %843 = vmatprep.subr.mxu0 0.0
    %844 = vmatpush1.msra.mxu0 %v820
    %845 = vmatprep.subr.mxu0 0.0
    %846 = vmatpush1.msra.mxu0 %v821
    %847 = vmatprep.subr.mxu0 0.0
    %848 = vmatpush1.msra.mxu0 %v822
    %849 = vmatprep.subr.mxu0 0.0
    %850 = vmatpush1.msra.mxu0 %v823
    %851 = vmatprep.subr.mxu0 0.0
    %852 = vmatpush1.msra.mxu0 0.0
    %853 = vmatprep.subr.mxu0 0.0
    %854 = vmatpush1.msra.mxu0 0.0
    %855 = vmatprep.subr.mxu0 0.0
    %856 = vmatpush1.msra.mxu0 0.0
    %857 = vmatprep.subr.mxu0 0.0
    %858 = vmatpush1.msra.mxu0 0.0
    %859 = vmatprep.subr.mxu0 0.0
    %860 = vmatpush1.msra.mxu0 0.0
    %861 = vmatprep.subr.mxu0 0.0
    %862 = vmatpush1.msra.mxu0 0.0
    %863 = vmatprep.subr.mxu0 0.0
    %864 = vmatpush1.msra.mxu0 0.0
    %865 = vmatprep.subr.mxu0 0.0
    %866 = vmatpush1.msra.mxu0 0.0
    %867 = vmatprep.subr.mxu0 0.0
    %868 = vmatpush1.msra.mxu0 0.0
    %869 = vmatprep.subr.mxu0 0.0
    %870 = vmatpush1.msra.mxu0 0.0
    %871 = vmatprep.subr.mxu0 0.0
    %872 = vmatpush1.msra.mxu0 0.0
    %873 = vmatprep.subr.mxu0 0.0
    %874 = vmatpush1.msra.mxu0 0.0
    %875 = vmatprep.subr.mxu0 0.0
    %876 = vmatpush1.msra.mxu0 0.0
    %877 = vmatprep.subr.mxu0 0.0
    %878 = vmatpush1.msra.mxu0 0.0
    %879 = vmatprep.subr.mxu0 0.0
    %880 = vmatpush1.msra.mxu0 0.0
    %881 = vmatprep.subr.mxu0 0.0
    %882 = vmatpush1.msra.mxu0 0.0
    %883 = vmatprep.subr.mxu0 0.0
    %884 = vmatpush1.msra.mxu0 0.0
    %885 = vmatprep.subr.mxu0 0.0
    %886 = vmatpush1.msra.mxu0 0.0
    %887 = vmatprep.subr.mxu0 0.0
    %888 = vmatpush1.msra.mxu0 0.0
    %889 = vmatprep.subr.mxu0 0.0
    %890 = vmatpush1.msra.mxu0 0.0
    %891 = vmatprep.subr.mxu0 0.0
    %892 = vmatpush1.msra.mxu0 0.0
    %893 = vmatprep.subr.mxu0 0.0
    %894 = vmatpush1.msra.mxu0 0.0
    %895 = vmatprep.subr.mxu0 0.0
    %896 = vmatpush1.msra.mxu0 0.0
    %897 = vmatprep.subr.mxu0 0.0
    %898 = vmatpush1.msra.mxu0 0.0
    %899 = vmatprep.subr.mxu0 0.0
    %900 = vmatpush1.msra.mxu0 0.0
    %901 = vmatprep.subr.mxu0 0.0
    %902 = vmatpush1.msra.mxu0 0.0
    %903 = vmatprep.subr.mxu0 0.0
    %904 = vmatpush1.msra.mxu0 0.0
    %905 = vmatprep.subr.mxu0 0.0
    %906 = vmatpush1.msra.mxu0 0.0
    %907 = vmatprep.mubr.f32.mxu0 0.0
    %908 = vmatmul.mubr.f32.gmra.mrb[0].mxu0 %v832
    %v909 = vpop.f32.mrb[0].mxu0
    %v910 = vadd.f32 %v829, %v909
    %v911 = vpop.f32.mrb[0].mxu0
    %912 = vmatprep.mubr.f32.mxu0 0.0
    %913 = vmatmul.mubr.f32.gmra.mrb[0].mxu0 %v835
    %v914 = vpop.f32.mrb[0].mxu0
    %v915 = vadd.f32 %v829, %v914
    %v916 = vpop.f32.mrb[0].mxu0
    %917 = vmatprep.mubr.f32.mxu0 0.0
    %918 = vmatmul.mubr.f32.gmra.mrb[0].mxu0 %v838
    %v919 = vpop.f32.mrb[0].mxu0
    %v920 = vadd.f32 %v829, %v919
    %v921 = vpop.f32.mrb[0].mxu0
    %922 = vmatprep.mubr.f32.mxu0 0.0
    %923 = vmatmul.mubr.f32.gmra.mrb[0].mxu0 %v841
    %v924 = vpop.f32.mrb[0].mxu0
    %v925 = vadd.f32 %v829, %v924
    %v926 = vpop.f32.mrb[0].mxu0
    %927 = vdwg.mxu0
    %v928 = vmax.f32 %v910, 0.0
    %v929 = vmax.f32 %v915, 0.0
    %v930 = vmax.f32 %v920, 0.0
    %v931 = vmax.f32 %v925, 0.0
    %v932 = vsel %vm229, %v928, 0.0
    %v933 = vsel %vm229, %v929, 0.0
    %v934 = vadd.f32 %v932, %v933
    %v935 = vsel %vm229, %v930, 0.0
    %v936 = vadd.f32 %v934, %v935
    %v937 = vsel %vm229, %v931, 0.0
    %v938 = vadd.f32 %v936, %v937
    %v939 = vrot.slane %v938, 4
    %v940 = vadd.f32 %v938, %v939
    %v941 = vrot.slane %v940, 2
    %v942 = vadd.f32 %v940, %v941
    %v943 = vrot.slane %v942, 1
    %v944 = vadd.f32 %v942, %v943
    %v945 = vmul.f32 %v944, 0.03125
    %v946 = vmul.f32 %v928, %v928
    %v947 = vmul.f32 %v929, %v929
    %v948 = vmul.f32 %v930, %v930
    %v949 = vmul.f32 %v931, %v931
    %v950 = vsel %vm229, %v946, 0.0
    %v951 = vsel %vm229, %v947, 0.0
    %v952 = vadd.f32 %v950, %v951
    %v953 = vsel %vm229, %v948, 0.0
    %v954 = vadd.f32 %v952, %v953
    %v955 = vsel %vm229, %v949, 0.0
    %v956 = vadd.f32 %v954, %v955
    %v957 = vrot.slane %v956, 4
    %v958 = vadd.f32 %v956, %v957
    %v959 = vrot.slane %v958, 2
    %v960 = vadd.f32 %v958, %v959
    %v961 = vrot.slane %v960, 1
    %v962 = vadd.f32 %v960, %v961
    %v963 = vmul.f32 %v962, 0.03125
    %v964 = vmul.f32 %v945, %v945
    %v965 = vsub.f32 %v963, %v964
    %v966 = vmax.f32 %v965, 0.0
    %v967 = vld [vmem:[#allocation17] sm:$0x1]
    %v968 = vadd.f32 %v966, 1e-05
    %v969 = vrsqrt.pop %v968
    %v970 = vmul.f32 %v967, %v969
    %v971 = vld [vmem:[%s14] sm:$0x1]
    %v972 = vmul.f32 %v945, %v970
    %v973 = vsub.f32 %v971, %v972
    %v975 = vlaneseq
    %v976 = vshrl.u32 %v975, 7
    %v977 = vsub.s32 0, %v976
    %v978 = vrot.slane %v970, %v977
    %v980 = vmul.f32 %v928, %v978
    %v981 = vmul.f32 %v929, %v978
    %v982 = vmul.f32 %v930, %v978
    %v983 = vmul.f32 %v931, %v978
    %v985 = vlaneseq
    %v986 = vshrl.u32 %v985, 7
    %v987 = vsub.s32 0, %v986
    %v988 = vrot.slane %v973, %v987
    %v990 = vadd.f32 %v980, %v988
    %v991 = vadd.f32 %v981, %v988
    %v992 = vadd.f32 %v982, %v988
    %v993 = vadd.f32 %v983, %v988
    %998 = vrot.lane.b32.xlu0 %v990, 32
    %v999 = vpop.permute.xlu0 %998
    %1000 = vrot.lane.b32.xlu0 %v991, 32
    %v1001 = vpop.permute.xlu0 %1000
    %1002 = vrot.lane.b32.xlu0 %v992, 32
    %v1003 = vpop.permute.xlu0 %1002
    %1004 = vrot.lane.b32.xlu0 %v993, 32
    %v1005 = vpop.permute.xlu0 %1004
    %vm1010 = vcmask 523520
    %1011 = vst.msk [vmem:[#allocation21] sm:$0xff] %vm1010, %v999
    %1012 = vst.msk [vmem:[#allocation21 + $0x8] sm:$0xff] %vm1010, %v1001
    %1013 = vst.msk [vmem:[#allocation21 + $0x10] sm:$0xff] %vm1010, %v1003
    %1014 = vst.msk [vmem:[#allocation21 + $0x18] sm:$0xff] %vm1010, %v1005
    %1015 = vmatprep.subr.mxu0 0.0
    %1016 = vmatpush1.msra.mxu0 %v990
    %1017 = vmatprep.subr.mxu0 0.0
    %1018 = vmatpush1.msra.mxu0 %v991
    %1019 = vmatprep.subr.mxu0 0.0
    %1020 = vmatpush1.msra.mxu0 %v992
    %1021 = vmatprep.subr.mxu0 0.0
    %1022 = vmatpush1.msra.mxu0 %v993
    %1023 = vmatprep.subr.mxu0 0.0
    %1024 = vmatpush1.msra.mxu0 0.0
    %1025 = vmatprep.subr.mxu0 0.0
    %1026 = vmatpush1.msra.mxu0 0.0
    %1027 = vmatprep.subr.mxu0 0.0
    %1028 = vmatpush1.msra.mxu0 0.0
    %1029 = vmatprep.subr.mxu0 0.0
    %1030 = vmatpush1.msra.mxu0 0.0
    %1031 = vmatprep.subr.mxu0 0.0
    %1032 = vmatpush1.msra.mxu0 0.0
    %1033 = vmatprep.subr.mxu0 0.0
    %1034 = vmatpush1.msra.mxu0 0.0
    %1035 = vmatprep.subr.mxu0 0.0
    %1036 = vmatpush1.msra.mxu0 0.0
    %1037 = vmatprep.subr.mxu0 0.0
    %1038 = vmatpush1.msra.mxu0 0.0
    %1039 = vmatprep.subr.mxu0 0.0
    %1040 = vmatpush1.msra.mxu0 0.0
    %1041 = vmatprep.subr.mxu0 0.0
    %1042 = vmatpush1.msra.mxu0 0.0
    %1043 = vmatprep.subr.mxu0 0.0
    %1044 = vmatpush1.msra.mxu0 0.0
    %1045 = vmatprep.subr.mxu0 0.0
    %1046 = vmatpush1.msra.mxu0 0.0
    %1047 = vmatprep.subr.mxu0 0.0
    %1048 = vmatpush1.msra.mxu0 0.0
    %1049 = vmatprep.subr.mxu0 0.0
    %1050 = vmatpush1.msra.mxu0 0.0
    %1051 = vmatprep.subr.mxu0 0.0
    %1052 = vmatpush1.msra.mxu0 0.0
    %1053 = vmatprep.subr.mxu0 0.0
    %1054 = vmatpush1.msra.mxu0 0.0
    %1055 = vmatprep.subr.mxu0 0.0
    %1056 = vmatpush1.msra.mxu0 0.0
    %1057 = vmatprep.subr.mxu0 0.0
    %1058 = vmatpush1.msra.mxu0 0.0
    %1059 = vmatprep.subr.mxu0 0.0
    %1060 = vmatpush1.msra.mxu0 0.0
    %1061 = vmatprep.subr.mxu0 0.0
    %1062 = vmatpush1.msra.mxu0 0.0
    %1063 = vmatprep.subr.mxu0 0.0
    %1064 = vmatpush1.msra.mxu0 0.0
    %1065 = vmatprep.subr.mxu0 0.0
    %1066 = vmatpush1.msra.mxu0 0.0
    %1067 = vmatprep.subr.mxu0 0.0
    %1068 = vmatpush1.msra.mxu0 0.0
    %1069 = vmatprep.subr.mxu0 0.0
    %1070 = vmatpush1.msra.mxu0 0.0
    %1071 = vmatprep.subr.mxu0 0.0
    %1072 = vmatpush1.msra.mxu0 0.0
    %1073 = vmatprep.subr.mxu0 0.0
    %1074 = vmatpush1.msra.mxu0 0.0
    %1075 = vmatprep.subr.mxu0 0.0
    %1076 = vmatpush1.msra.mxu0 0.0
    %1077 = vmatprep.subr.mxu0 0.0
    %1078 = vmatpush1.msra.mxu0 0.0
    %1079 = vmatprep.mubr.f32.mxu0 0.0
    %1080 = vmatmul.mubr.f32.gmra.mrb[0].mxu0 %v579
    %v1081 = vpop.f32.mrb[0].mxu0
    %v1082 = vadd.f32 0.0, %v1081
    %v1083 = vpop.f32.mrb[0].mxu0
    %1084 = vdwg.mxu0
    %1086 = vrot.lane.b32.xlu0 %v1082, 32
    %v1087 = vpop.permute.xlu0 %1086
    %vm1089 = vcmask 517376
    %1090 = vst.msk [vmem:[#allocation20] sm:$0x3] %vm1089, %v1087
    %v1091 = vpack.c.bf16 %v991, %v990
    %v1092 = vpack.c.bf16 %v993, %v992
    %1093 = vmatprep.subr.bf16.mxu0 0
    %1094 = vmatpush1.bf16.msra.mxu0 %v1091
    %1095 = vmatprep.subr.bf16.mxu0 0
    %1096 = vmatpush1.bf16.msra.mxu0 %v1092
    %1097 = vmatprep.subr.bf16.mxu0 0
    %1098 = vmatpush1.bf16.msra.mxu0 0
    %1099 = vmatprep.subr.bf16.mxu0 0
    %1100 = vmatpush1.bf16.msra.mxu0 0
    %1101 = vmatprep.subr.bf16.mxu0 0
    %1102 = vmatpush1.bf16.msra.mxu0 0
    %1103 = vmatprep.subr.bf16.mxu0 0
    %1104 = vmatpush1.bf16.msra.mxu0 0
    %1105 = vmatprep.subr.bf16.mxu0 0
    %1106 = vmatpush1.bf16.msra.mxu0 0
    %1107 = vmatprep.subr.bf16.mxu0 0
    %1108 = vmatpush1.bf16.msra.mxu0 0
    %1109 = vmatprep.subr.bf16.mxu0 0
    %1110 = vmatpush1.bf16.msra.mxu0 0
    %1111 = vmatprep.subr.bf16.mxu0 0
    %1112 = vmatpush1.bf16.msra.mxu0 0
    %1113 = vmatprep.subr.bf16.mxu0 0
    %1114 = vmatpush1.bf16.msra.mxu0 0
    %1115 = vmatprep.subr.bf16.mxu0 0
    %1116 = vmatpush1.bf16.msra.mxu0 0
    %1117 = vmatprep.subr.bf16.mxu0 0
    %1118 = vmatpush1.bf16.msra.mxu0 0
    %1119 = vmatprep.subr.bf16.mxu0 0
    %1120 = vmatpush1.bf16.msra.mxu0 0
    %1121 = vmatprep.subr.bf16.mxu0 0
    %1122 = vmatpush1.bf16.msra.mxu0 0
    %1123 = vmatprep.subr.bf16.mxu0 0
    %1124 = vmatpush1.bf16.msra.mxu0 0
    %1125 = vmatprep.mubr.bf16.mxu0 0
    %1126 = vmatmul.mubr.bf16.gmra.mrb[0].mxu0 %v231
    %v1127 = vpop.f32.mrb[0].mxu0
    %v1128 = vadd.f32 0.0, %v1127
    %v1129 = vpop.f32.mrb[0].mxu0
    %v1130 = vpop.f32.mrb[0].mxu0
    %v1131 = vadd.f32 0.0, %v1130
    %v1132 = vpop.f32.mrb[0].mxu0
    %1133 = vmatprep.mubr.bf16.mxu0 0
    %1134 = vmatmul.mubr.bf16.gmra.mrb[0].mxu0 %v234
    %v1135 = vpop.f32.mrb[0].mxu0
    %v1136 = vadd.f32 0.0, %v1135
    %v1137 = vpop.f32.mrb[0].mxu0
    %v1138 = vpop.f32.mrb[0].mxu0
    %v1139 = vadd.f32 0.0, %v1138
    %v1140 = vpop.f32.mrb[0].mxu0
    %1141 = vdwg.mxu0
    %v1142 = vadd.f32 %v990, %v1128
    %v1143 = vadd.f32 %v991, %v1131
    %v1144 = vadd.f32 %v992, %v1136
    %v1145 = vadd.f32 %v993, %v1139
    %v1146 = vld [vmem:[%s15] sm:$0xff]
    %v1147 = vld [vmem:[%s15 + $0x8] sm:$0xff]
    %v1148 = vld [vmem:[%s15 + $0x10] sm:$0xff]
    %v1149 = vld [vmem:[%s15 + $0x18] sm:$0xff]
    %v1150 = vld [vmem:[%s16] sm:$0x1]
    %v1152 = vlaneseq
    %v1153 = vshrl.u32 %v1152, 7
    %v1154 = vsub.s32 0, %v1153
    %v1155 = vrot.slane %v1150, %v1154
    %v1158 = vsel %vm229, %v1142, 0
    %v1161 = vsel %vm229, %v1143, 0
    %v1164 = vsel %vm229, %v1144, 0
    %v1167 = vsel %vm229, %v1145, 0
    %1169 = vmatprep.subr.mxu0 0.0
    %1170 = vmatpush1.msra.mxu0 %v1146
    %1171 = vmatprep.subr.mxu0 0.0
    %1172 = vmatpush1.msra.mxu0 %v1147
    %1173 = vmatprep.subr.mxu0 0.0
    %1174 = vmatpush1.msra.mxu0 %v1148
    %1175 = vmatprep.subr.mxu0 0.0
    %1176 = vmatpush1.msra.mxu0 %v1149
    %1177 = vmatprep.subr.mxu0 0.0
    %1178 = vmatpush1.msra.mxu0 0.0
    %1179 = vmatprep.subr.mxu0 0.0
    %1180 = vmatpush1.msra.mxu0 0.0
    %1181 = vmatprep.subr.mxu0 0.0
    %1182 = vmatpush1.msra.mxu0 0.0
    %1183 = vmatprep.subr.mxu0 0.0
    %1184 = vmatpush1.msra.mxu0 0.0
    %1185 = vmatprep.subr.mxu0 0.0
    %1186 = vmatpush1.msra.mxu0 0.0
    %1187 = vmatprep.subr.mxu0 0.0
    %1188 = vmatpush1.msra.mxu0 0.0
    %1189 = vmatprep.subr.mxu0 0.0
    %1190 = vmatpush1.msra.mxu0 0.0
    %1191 = vmatprep.subr.mxu0 0.0
    %1192 = vmatpush1.msra.mxu0 0.0
    %1193 = vmatprep.subr.mxu0 0.0
    %1194 = vmatpush1.msra.mxu0 0.0
    %1195 = vmatprep.subr.mxu0 0.0
    %1196 = vmatpush1.msra.mxu0 0.0
    %1197 = vmatprep.subr.mxu0 0.0
    %1198 = vmatpush1.msra.mxu0 0.0
    %1199 = vmatprep.subr.mxu0 0.0
    %1200 = vmatpush1.msra.mxu0 0.0
    %1201 = vmatprep.subr.mxu0 0.0
    %1202 = vmatpush1.msra.mxu0 0.0
    %1203 = vmatprep.subr.mxu0 0.0
    %1204 = vmatpush1.msra.mxu0 0.0
    %1205 = vmatprep.subr.mxu0 0.0
    %1206 = vmatpush1.msra.mxu0 0.0
    %1207 = vmatprep.subr.mxu0 0.0
    %1208 = vmatpush1.msra.mxu0 0.0
    %1209 = vmatprep.subr.mxu0 0.0
    %1210 = vmatpush1.msra.mxu0 0.0
    %1211 = vmatprep.subr.mxu0 0.0
    %1212 = vmatpush1.msra.mxu0 0.0
    %1213 = vmatprep.subr.mxu0 0.0
    %1214 = vmatpush1.msra.mxu0 0.0
    %1215 = vmatprep.subr.mxu0 0.0
    %1216 = vmatpush1.msra.mxu0 0.0
    %1217 = vmatprep.subr.mxu0 0.0
    %1218 = vmatpush1.msra.mxu0 0.0
    %1219 = vmatprep.subr.mxu0 0.0
    %1220 = vmatpush1.msra.mxu0 0.0
    %1221 = vmatprep.subr.mxu0 0.0
    %1222 = vmatpush1.msra.mxu0 0.0
    %1223 = vmatprep.subr.mxu0 0.0
    %1224 = vmatpush1.msra.mxu0 0.0
    %1225 = vmatprep.subr.mxu0 0.0
    %1226 = vmatpush1.msra.mxu0 0.0
    %1227 = vmatprep.subr.mxu0 0.0
    %1228 = vmatpush1.msra.mxu0 0.0
    %1229 = vmatprep.subr.mxu0 0.0
    %1230 = vmatpush1.msra.mxu0 0.0
    %1231 = vmatprep.subr.mxu0 0.0
    %1232 = vmatpush1.msra.mxu0 0.0
    %1233 = vmatprep.mubr.f32.mxu0 0.0
    %1234 = vmatmul.mubr.f32.gmra.mrb[0].mxu0 %v1158
    %v1235 = vpop.f32.mrb[0].mxu0
    %v1236 = vadd.f32 %v1155, %v1235
    %v1237 = vpop.f32.mrb[0].mxu0
    %1238 = vmatprep.mubr.f32.mxu0 0.0
    %1239 = vmatmul.mubr.f32.gmra.mrb[0].mxu0 %v1161
    %v1240 = vpop.f32.mrb[0].mxu0
    %v1241 = vadd.f32 %v1155, %v1240
    %v1242 = vpop.f32.mrb[0].mxu0
    %1243 = vmatprep.mubr.f32.mxu0 0.0
    %1244 = vmatmul.mubr.f32.gmra.mrb[0].mxu0 %v1164
    %v1245 = vpop.f32.mrb[0].mxu0
    %v1246 = vadd.f32 %v1155, %v1245
    %v1247 = vpop.f32.mrb[0].mxu0
    %1248 = vmatprep.mubr.f32.mxu0 0.0
    %1249 = vmatmul.mubr.f32.gmra.mrb[0].mxu0 %v1167
    %v1250 = vpop.f32.mrb[0].mxu0
    %v1251 = vadd.f32 %v1155, %v1250
    %v1252 = vpop.f32.mrb[0].mxu0
    %1253 = vdwg.mxu0
    %v1254 = vmax.f32 %v1236, 0.0
    %v1255 = vmax.f32 %v1241, 0.0
    %v1256 = vmax.f32 %v1246, 0.0
    %v1257 = vmax.f32 %v1251, 0.0
    %v1258 = vld [vmem:[#allocation19] sm:$0xff]
    %v1259 = vld [vmem:[#allocation19 + $0x8] sm:$0xff]
    %v1260 = vld [vmem:[#allocation19 + $0x10] sm:$0xff]
    %v1261 = vld [vmem:[#allocation19 + $0x18] sm:$0xff]
    %v1262 = vld [vmem:[%s18] sm:$0x1]
    %v1264 = vlaneseq
    %v1265 = vshrl.u32 %v1264, 7
    %v1266 = vsub.s32 0, %v1265
    %v1267 = vrot.slane %v1262, %v1266
    %v1270 = vsel %vm229, %v1254, 0
    %v1273 = vsel %vm229, %v1255, 0
    %v1276 = vsel %vm229, %v1256, 0
    %v1279 = vsel %vm229, %v1257, 0
    %1281 = vmatprep.subr.mxu0 0.0
    %1282 = vmatpush1.msra.mxu0 %v1258
    %1283 = vmatprep.subr.mxu0 0.0
    %1284 = vmatpush1.msra.mxu0 %v1259
    %1285 = vmatprep.subr.mxu0 0.0
    %1286 = vmatpush1.msra.mxu0 %v1260
    %1287 = vmatprep.subr.mxu0 0.0
    %1288 = vmatpush1.msra.mxu0 %v1261
    %1289 = vmatprep.subr.mxu0 0.0
    %1290 = vmatpush1.msra.mxu0 0.0
    %1291 = vmatprep.subr.mxu0 0.0
    %1292 = vmatpush1.msra.mxu0 0.0
    %1293 = vmatprep.subr.mxu0 0.0
    %1294 = vmatpush1.msra.mxu0 0.0
    %1295 = vmatprep.subr.mxu0 0.0
    %1296 = vmatpush1.msra.mxu0 0.0
    %1297 = vmatprep.subr.mxu0 0.0
    %1298 = vmatpush1.msra.mxu0 0.0
    %1299 = vmatprep.subr.mxu0 0.0
    %1300 = vmatpush1.msra.mxu0 0.0
    %1301 = vmatprep.subr.mxu0 0.0
    %1302 = vmatpush1.msra.mxu0 0.0
    %1303 = vmatprep.subr.mxu0 0.0
    %1304 = vmatpush1.msra.mxu0 0.0
    %1305 = vmatprep.subr.mxu0 0.0
    %1306 = vmatpush1.msra.mxu0 0.0
    %1307 = vmatprep.subr.mxu0 0.0
    %1308 = vmatpush1.msra.mxu0 0.0
    %1309 = vmatprep.subr.mxu0 0.0
    %1310 = vmatpush1.msra.mxu0 0.0
    %1311 = vmatprep.subr.mxu0 0.0
    %1312 = vmatpush1.msra.mxu0 0.0
    %1313 = vmatprep.subr.mxu0 0.0
    %1314 = vmatpush1.msra.mxu0 0.0
    %1315 = vmatprep.subr.mxu0 0.0
    %1316 = vmatpush1.msra.mxu0 0.0
    %1317 = vmatprep.subr.mxu0 0.0
    %1318 = vmatpush1.msra.mxu0 0.0
    %1319 = vmatprep.subr.mxu0 0.0
    %1320 = vmatpush1.msra.mxu0 0.0
    %1321 = vmatprep.subr.mxu0 0.0
    %1322 = vmatpush1.msra.mxu0 0.0
    %1323 = vmatprep.subr.mxu0 0.0
    %1324 = vmatpush1.msra.mxu0 0.0
    %1325 = vmatprep.subr.mxu0 0.0
    %1326 = vmatpush1.msra.mxu0 0.0
    %1327 = vmatprep.subr.mxu0 0.0
    %1328 = vmatpush1.msra.mxu0 0.0
    %1329 = vmatprep.subr.mxu0 0.0
    %1330 = vmatpush1.msra.mxu0 0.0
    %1331 = vmatprep.subr.mxu0 0.0
    %1332 = vmatpush1.msra.mxu0 0.0
    %1333 = vmatprep.subr.mxu0 0.0
    %1334 = vmatpush1.msra.mxu0 0.0
    %1335 = vmatprep.subr.mxu0 0.0
    %1336 = vmatpush1.msra.mxu0 0.0
    %1337 = vmatprep.subr.mxu0 0.0
    %1338 = vmatpush1.msra.mxu0 0.0
    %1339 = vmatprep.subr.mxu0 0.0
    %1340 = vmatpush1.msra.mxu0 0.0
    %1341 = vmatprep.subr.mxu0 0.0
    %1342 = vmatpush1.msra.mxu0 0.0
    %1343 = vmatprep.subr.mxu0 0.0
    %1344 = vmatpush1.msra.mxu0 0.0
    %1345 = vmatprep.mubr.f32.mxu0 0.0
    %1346 = vmatmul.mubr.f32.gmra.mrb[0].mxu0 %v1270
    %v1347 = vpop.f32.mrb[0].mxu0
    %v1348 = vadd.f32 %v1267, %v1347
    %v1349 = vpop.f32.mrb[0].mxu0
    %1350 = vmatprep.mubr.f32.mxu0 0.0
    %1351 = vmatmul.mubr.f32.gmra.mrb[0].mxu0 %v1273
    %v1352 = vpop.f32.mrb[0].mxu0
    %v1353 = vadd.f32 %v1267, %v1352
    %v1354 = vpop.f32.mrb[0].mxu0
    %1355 = vmatprep.mubr.f32.mxu0 0.0
    %1356 = vmatmul.mubr.f32.gmra.mrb[0].mxu0 %v1276
    %v1357 = vpop.f32.mrb[0].mxu0
    %v1358 = vadd.f32 %v1267, %v1357
    %v1359 = vpop.f32.mrb[0].mxu0
    %1360 = vmatprep.mubr.f32.mxu0 0.0
    %1361 = vmatmul.mubr.f32.gmra.mrb[0].mxu0 %v1279
    %v1362 = vpop.f32.mrb[0].mxu0
    %v1363 = vadd.f32 %v1267, %v1362
    %v1364 = vpop.f32.mrb[0].mxu0
    %1365 = vdwg.mxu0
    %v1366 = vmax.f32 %v1348, 0.0
    %v1367 = vmax.f32 %v1353, 0.0
    %v1368 = vmax.f32 %v1358, 0.0
    %v1369 = vmax.f32 %v1363, 0.0
    %v1370 = vsel %vm229, %v1366, 0.0
    %v1371 = vsel %vm229, %v1367, 0.0
    %v1372 = vadd.f32 %v1370, %v1371
    %v1373 = vsel %vm229, %v1368, 0.0
    %v1374 = vadd.f32 %v1372, %v1373
    %v1375 = vsel %vm229, %v1369, 0.0
    %v1376 = vadd.f32 %v1374, %v1375
    %v1377 = vrot.slane %v1376, 4
    %v1378 = vadd.f32 %v1376, %v1377
    %v1379 = vrot.slane %v1378, 2
    %v1380 = vadd.f32 %v1378, %v1379
    %v1381 = vrot.slane %v1380, 1
    %v1382 = vadd.f32 %v1380, %v1381
    %v1383 = vmul.f32 %v1382, 0.03125
    %v1384 = vmul.f32 %v1366, %v1366
    %v1385 = vmul.f32 %v1367, %v1367
    %v1386 = vmul.f32 %v1368, %v1368
    %v1387 = vmul.f32 %v1369, %v1369
    %v1388 = vsel %vm229, %v1384, 0.0
    %v1389 = vsel %vm229, %v1385, 0.0
    %v1390 = vadd.f32 %v1388, %v1389
    %v1391 = vsel %vm229, %v1386, 0.0
    %v1392 = vadd.f32 %v1390, %v1391
    %v1393 = vsel %vm229, %v1387, 0.0
    %v1394 = vadd.f32 %v1392, %v1393
    %v1395 = vrot.slane %v1394, 4
    %v1396 = vadd.f32 %v1394, %v1395
    %v1397 = vrot.slane %v1396, 2
    %v1398 = vadd.f32 %v1396, %v1397
    %v1399 = vrot.slane %v1398, 1
    %v1400 = vadd.f32 %v1398, %v1399
    %v1401 = vmul.f32 %v1400, 0.03125
    %v1402 = vmul.f32 %v1383, %v1383
    %v1403 = vsub.f32 %v1401, %v1402
    %v1404 = vmax.f32 %v1403, 0.0
    %v1405 = vld [vmem:[%s19] sm:$0x1]
    %v1406 = vadd.f32 %v1404, 1e-05
    %v1407 = vrsqrt.pop %v1406
    %v1408 = vmul.f32 %v1405, %v1407
    %v1409 = vld [vmem:[%s20] sm:$0x1]
    %v1410 = vmul.f32 %v1383, %v1408
    %v1411 = vsub.f32 %v1409, %v1410
    %v1413 = vlaneseq
    %v1414 = vshrl.u32 %v1413, 7
    %v1415 = vsub.s32 0, %v1414
    %v1416 = vrot.slane %v1408, %v1415
    %v1418 = vmul.f32 %v1366, %v1416
    %v1419 = vmul.f32 %v1367, %v1416
    %v1420 = vmul.f32 %v1368, %v1416
    %v1421 = vmul.f32 %v1369, %v1416
    %v1423 = vlaneseq
    %v1424 = vshrl.u32 %v1423, 7
    %v1425 = vsub.s32 0, %v1424
    %v1426 = vrot.slane %v1411, %v1425
    %v1428 = vadd.f32 %v1418, %v1426
    %v1429 = vadd.f32 %v1419, %v1426
    %v1430 = vadd.f32 %v1420, %v1426
    %v1431 = vadd.f32 %v1421, %v1426
    %1436 = vrot.lane.b32.xlu0 %v1428, 64
    %v1437 = vpop.permute.xlu0 %1436
    %1438 = vrot.lane.b32.xlu0 %v1429, 64
    %v1439 = vpop.permute.xlu0 %1438
    %1440 = vrot.lane.b32.xlu0 %v1430, 64
    %v1441 = vpop.permute.xlu0 %1440
    %1442 = vrot.lane.b32.xlu0 %v1431, 64
    %v1443 = vpop.permute.xlu0 %1442
    %vm1448 = vcmask 785920
    %1449 = vst.msk [vmem:[#allocation21] sm:$0xff] %vm1448, %v1437
    %1450 = vst.msk [vmem:[#allocation21 + $0x8] sm:$0xff] %vm1448, %v1439
    %1451 = vst.msk [vmem:[#allocation21 + $0x10] sm:$0xff] %vm1448, %v1441
    %1452 = vst.msk [vmem:[#allocation21 + $0x18] sm:$0xff] %vm1448, %v1443
    %1453 = vmatprep.subr.mxu0 0.0
    %1454 = vmatpush1.msra.mxu0 %v1428
    %1455 = vmatprep.subr.mxu0 0.0
    %1456 = vmatpush1.msra.mxu0 %v1429
    %1457 = vmatprep.subr.mxu0 0.0
    %1458 = vmatpush1.msra.mxu0 %v1430
    %1459 = vmatprep.subr.mxu0 0.0
    %1460 = vmatpush1.msra.mxu0 %v1431
    %1461 = vmatprep.subr.mxu0 0.0
    %1462 = vmatpush1.msra.mxu0 0.0
    %1463 = vmatprep.subr.mxu0 0.0
    %1464 = vmatpush1.msra.mxu0 0.0
    %1465 = vmatprep.subr.mxu0 0.0
    %1466 = vmatpush1.msra.mxu0 0.0
    %1467 = vmatprep.subr.mxu0 0.0
    %1468 = vmatpush1.msra.mxu0 0.0
    %1469 = vmatprep.subr.mxu0 0.0
    %1470 = vmatpush1.msra.mxu0 0.0
    %1471 = vmatprep.subr.mxu0 0.0
    %1472 = vmatpush1.msra.mxu0 0.0
    %1473 = vmatprep.subr.mxu0 0.0
    %1474 = vmatpush1.msra.mxu0 0.0
    %1475 = vmatprep.subr.mxu0 0.0
    %1476 = vmatpush1.msra.mxu0 0.0
    %1477 = vmatprep.subr.mxu0 0.0
    %1478 = vmatpush1.msra.mxu0 0.0
    %1479 = vmatprep.subr.mxu0 0.0
    %1480 = vmatpush1.msra.mxu0 0.0
    %1481 = vmatprep.subr.mxu0 0.0
    %1482 = vmatpush1.msra.mxu0 0.0
    %1483 = vmatprep.subr.mxu0 0.0
    %1484 = vmatpush1.msra.mxu0 0.0
    %1485 = vmatprep.subr.mxu0 0.0
    %1486 = vmatpush1.msra.mxu0 0.0
    %1487 = vmatprep.subr.mxu0 0.0
    %1488 = vmatpush1.msra.mxu0 0.0
    %1489 = vmatprep.subr.mxu0 0.0
    %1490 = vmatpush1.msra.mxu0 0.0
    %1491 = vmatprep.subr.mxu0 0.0
    %1492 = vmatpush1.msra.mxu0 0.0
    %1493 = vmatprep.subr.mxu0 0.0
    %1494 = vmatpush1.msra.mxu0 0.0
    %1495 = vmatprep.subr.mxu0 0.0
    %1496 = vmatpush1.msra.mxu0 0.0
    %1497 = vmatprep.subr.mxu0 0.0
    %1498 = vmatpush1.msra.mxu0 0.0
    %1499 = vmatprep.subr.mxu0 0.0
    %1500 = vmatpush1.msra.mxu0 0.0
    %1501 = vmatprep.subr.mxu0 0.0
    %1502 = vmatpush1.msra.mxu0 0.0
    %1503 = vmatprep.subr.mxu0 0.0
    %1504 = vmatpush1.msra.mxu0 0.0
    %1505 = vmatprep.subr.mxu0 0.0
    %1506 = vmatpush1.msra.mxu0 0.0
    %1507 = vmatprep.subr.mxu0 0.0
    %1508 = vmatpush1.msra.mxu0 0.0
    %1509 = vmatprep.subr.mxu0 0.0
    %1510 = vmatpush1.msra.mxu0 0.0
    %1511 = vmatprep.subr.mxu0 0.0
    %1512 = vmatpush1.msra.mxu0 0.0
    %1513 = vmatprep.subr.mxu0 0.0
    %1514 = vmatpush1.msra.mxu0 0.0
    %1515 = vmatprep.subr.mxu0 0.0
    %1516 = vmatpush1.msra.mxu0 0.0
    %1517 = vmatprep.mubr.f32.mxu0 0.0
    %1518 = vmatmul.mubr.f32.gmra.mrb[0].mxu0 %v579
    %v1519 = vpop.f32.mrb[0].mxu0
    %v1520 = vadd.f32 0.0, %v1519
    %v1521 = vpop.f32.mrb[0].mxu0
    %1522 = vdwg.mxu0
    %1524 = vrot.lane.b32.xlu0 %v1520, 64
    %v1525 = vpop.permute.xlu0 %1524
    %vm1527 = vcmask 779776
    %1528 = vst.msk [vmem:[#allocation20] sm:$0x3] %vm1527, %v1525
    // Predicated region
    $region130: #{tpu_custom_call.1} parent=1 // pred_check
      _
    $region131: #{tpu_custom_call.1} parent=1 // pred_check_branch
      %1530 = sbr.rel (0) target = $region133
    $region132: #{tpu_custom_call.1} parent=1 // pred_region
      %s1532 = ssub.s32 32, 32
      %1533 = vsyncadd [#allocation4], %s1532
      %s1535 = sshll.u32 [#allocation20], 4
      %s1536 = int_to_ptr.vmem [resolvable:$true] %s1535
      %1538 = dma.vmem_to_hbm [thread:$0]  %s1536, 32, %s21, [#allocation4]
    $region133: #{tpu_custom_call.1} parent=1 // pred_fallthru
      _
    // Predicated region
    $region134: #{tpu_custom_call.1} parent=1 // pred_check
      _
    $region135: #{tpu_custom_call.1} parent=1 // pred_check_branch
      %1540 = sbr.rel (0) target = $region137
    $region136: #{tpu_custom_call.1} parent=1 // pred_region
      %s1542 = ssub.s32 512, 512
      %1543 = vsyncadd [#allocation22], %s1542
      %s1544 = sshll.u32 [#allocation21], 4
      %s1545 = int_to_ptr.vmem [resolvable:$true] %s1544
      %1550 = dma.vmem_to_hbm [thread:$0]  %s1545, 512, %s22, [#allocation22], 128, 128, 8
    $region137: #{tpu_custom_call.1} parent=1 // pred_fallthru
      _
    // Predicated region
    $region138: #{tpu_custom_call.1} parent=1 // pred_check
      _
    $region139: #{tpu_custom_call.1} parent=1 // pred_check_branch
      %1552 = sbr.rel (0) target = $region141
    $region140: #{tpu_custom_call.1} parent=1 // pred_region
      %1553 = dma.done [#allocation4], 32
    $region141: #{tpu_custom_call.1} parent=1 // pred_fallthru
      _
    // Predicated region
    $region142: #{tpu_custom_call.1} parent=1 // pred_check
      _
    $region143: #{tpu_custom_call.1} parent=1 // pred_check_branch
      %1555 = sbr.rel (0) target = $region145
    $region144: #{tpu_custom_call.1} parent=1 // pred_region
      %1556 = dma.done [#allocation22], 512
    $region145: #{tpu_custom_call.1} parent=1 // pred_fallthru
      _
    %1557 = vsyncpa [#allocation3], 1
    %1558 = vsyncpa [#allocation6], 1
    %1559 = vsyncpa [#allocation9], 1
    %1560 = vsyncpa [#allocation12], 1
    %1561 = vsyncpa [#allocation15], 1
    %1562 = vsyncpa [#allocation18], 1
    %1563 = vsyncpa [#allocation4], 1
    %1564 = vsyncpa [#allocation22], 1

</llo_original>
